<compile_context>
chip_gen: v7x
topology: tpu7x:2x2x1
jax: 0.10.0
libtpu: 0.0.40
codegen_flags: <defaults>
</compile_context>

<pallas_src>
import functools

import numpy as np
import jax
import jax.numpy as jnp
from jax.experimental import pallas as pl
from jax.experimental.pallas import tpu as pltpu


def _round_up(x, m):
    return ((x + m - 1) // m) * m


def _bottleneck_body(xp_ref, hw_ref, xtop_ref, xbot_ref,
                     w1_ref, s1_ref, b1_ref,
                     w2_ref, s2_ref, b2_ref,
                     w3_ref, s3_ref, b3_ref,
                     out_ref, idx_ref, pad_ref,
                     *, W2, OFF, gemm_dtype):
    f32 = jnp.float32
    TM = xp_ref.shape[2]                    # pixels handled this step (lane dim)
    Cin = idx_ref.shape[1]
    Cint = w1_ref.shape[0]
    Cout = out_ref.shape[1]

    xp = xp_ref[0]                          # (4*Cin, TM) f32, phases in sublanes
    hrow = hw_ref[0:1, :]                   # (1, TM) int32: global downsampled row
    wcol = hw_ref[1:2, :]                   # (1, TM) int32: column

    # --- hoisted per-step index vectors / masks (computed once, reused) ------
    base = 4 * W2 * hrow + 2 * wcol         # (2h)*W + 2w with W = 2*W2
    base_b = base + 2 * W2
    mask_l = wcol >= 1                      # conv2 left-border mask
    mask_r = wcol <= W2 - 2                 # conv2 right-border mask

    # --- main branch: 2x2 stride-2 max pool + argmax indices ------------------
    v00 = xp[0 * Cin:1 * Cin, :]
    v01 = xp[1 * Cin:2 * Cin, :]
    v10 = xp[2 * Cin:3 * Cin, :]
    v11 = xp[3 * Cin:4 * Cin, :]
    m_a = jnp.maximum(v00, v01)
    i_a = jnp.where(v01 > v00, base + 1, base)      # strict > == first-occurrence
    m_b = jnp.maximum(v10, v11)
    i_b = jnp.where(v11 > v10, base_b + 1, base_b)
    pooled = jnp.maximum(m_a, m_b)                  # (Cin, TM) f32
    idx = jnp.where(m_b > m_a, i_b, i_a)            # (Cin, TM) int32

    # --- ext branch ------------------------------------------------------------
    # conv1 (2x2 stride 2) == one GEMM with K = 4*Cin (phases folded into K).
    w1 = w1_ref[...]
    h1 = jnp.dot(w1, xp.astype(gemm_dtype), preferred_element_type=f32)
    h1 = jnp.maximum(h1 * s1_ref[...] + b1_ref[...], 0.0)        # folded BN + ReLU
    pad_ref[:, OFF:OFF + TM] = h1.astype(gemm_dtype)             # lane-aligned store

    # conv2 halo rows: recomputed via the tiny conv1 GEMM, zero at image border.
    if xtop_ref is None:
        zrow = jnp.zeros((Cint, W2), gemm_dtype)
        pad_ref[:, OFF - W2:OFF] = zrow
        pad_ref[:, OFF + TM:OFF + TM + W2] = zrow
    else:
        r = pl.program_id(1)
        last = pl.num_programs(1) - 1
        ht = jnp.dot(w1, xtop_ref[0].astype(gemm_dtype), preferred_element_type=f32)
        ht = jnp.maximum(ht * s1_ref[...] + b1_ref[...], 0.0)
        ht = ht * (r > 0).astype(f32)                            # top of image -> 0
        pad_ref[:, OFF - W2:OFF] = ht.astype(gemm_dtype)
        hb = jnp.dot(w1, xbot_ref[0].astype(gemm_dtype), preferred_element_type=f32)
        hb = jnp.maximum(hb * s1_ref[...] + b1_ref[...], 0.0)
        hb = hb * (r < last).astype(f32)                         # bottom of image -> 0
        pad_ref[:, OFF + TM:OFF + TM + W2] = hb.astype(gemm_dtype)

    # conv2 (3x3 pad 1): 9 small accumulated GEMMs straight off the padded h1
    # (no materialised im2col buffer).  Guard elements past the halo rows are
    # only ever read under masked (border) columns, so they are never used.
    h2 = None
    t = 0
    for dh in (-1, 0, 1):
        for dw in (-1, 0, 1):
            s = OFF + dh * W2 + dw
            tap = pad_ref[:, s:s + TM]                           # (Cint, TM)
            if dw == -1:
                tap = jnp.where(mask_l, tap, 0)
            elif dw == 1:
                tap = jnp.where(mask_r, tap, 0)
            c = jnp.dot(w2_ref[:, t * Cint:(t + 1) * Cint], tap,
                        preferred_element_type=f32)
            h2 = c if h2 is None else h2 + c
            t += 1
    h2 = jnp.maximum(h2 * s2_ref[...] + b2_ref[...], 0.0)        # folded BN + ReLU

    # conv3 (1x1 expansion) + folded BN + ReLU.  Dropout2d(p=0) is the identity.
    h3 = jnp.dot(w3_ref[...], h2.astype(gemm_dtype), preferred_element_type=f32)
    h3 = jnp.maximum(h3 * s3_ref[...] + b3_ref[...], 0.0)

    # Epilogue: pooled branch only touches the first Cin channels; cast at store.
    out_dt = out_ref.dtype
    out_ref[0, 0:Cin, :] = jnp.maximum(h3[0:Cin, :] + pooled, 0.0).astype(out_dt)
    if Cout > Cin:
        out_ref[0, Cin:, :] = h3[Cin:, :].astype(out_dt)         # already >= 0
    idx_ref[0, :, :] = idx


def _pick_tile_rows(H2, W2, tile_rows=None, target_lanes=2048):
    # Halo blocks are one downsampled row (W2 lanes) wide; they only satisfy the
    # (8, 128) block-shape rule when W2 % 128 == 0.  Otherwise fall back to one
    # whole image per grid step (no halo streams needed).
    if W2 % 128 != 0:
        return H2
    if tile_rows is None:
        tile_rows = max(1, target_lanes // W2)
    tile_rows = max(1, min(H2, int(tile_rows)))
    while H2 % tile_rows != 0:
        tile_rows -= 1
    return tile_rows


def downsampling_bottleneck(x_nchw, params, *, out_dtype=jnp.float32,
                            gemm_dtype=jnp.float32, tile_rows=None):
    """x_nchw: (N, Cin, H, W) float32.  Returns (out_nchw, max_indices_nchw)."""
    N, Cin, H, W = x_nchw.shape
    H2, W2 = H // 2, W // 2
    M = H2 * W2
    Cint = params["w1"].shape[0]
    Cout = params["w3"].shape[0]
    eps = 1e-5
    f32 = jnp.float32

    TR = _pick_tile_rows(H2, W2, tile_rows)
    n_tiles = H2 // TR
    TM = TR * W2
    tiled = n_tiles > 1
    OFF = _round_up(W2 + 1, 128)                  # lane-aligned interior offset
    pad_len = OFF + (TR + 1) * W2 + 128           # main + 2 halo rows + guards

    x = x_nchw.astype(f32)
    # TODO(synk): phase-packing transpose = one extra HBM pass over the input;
    # fuse into the producer of x in a full network.
    xp = (x.reshape(N, Cin, H2, 2, W2, 2)
           .transpose(0, 3, 5, 1, 2, 4)
           .reshape(N, 4 * Cin, M))

    # (h, w) coordinates of each flattened output pixel (pooling-index metadata).
    hw = jnp.stack(
        [jnp.repeat(jnp.arange(H2, dtype=jnp.int32), W2),
         jnp.tile(jnp.arange(W2, dtype=jnp.int32), H2)], axis=0)      # (2, M)

    def fold_bn(g, be, m, v):
        s = g / jnp.sqrt(v + eps)
        return (s.reshape(-1, 1).astype(f32),
                (be - m * s).reshape(-1, 1).astype(f32))

    s1, b1 = fold_bn(params["g1"], params["be1"], params["m1"], params["v1"])
    s2, b2 = fold_bn(params["g2"], params["be2"], params["m2"], params["v2"])
    s3, b3 = fold_bn(params["g3"], params["be3"], params["m3"], params["v3"])

    # OIHW -> (Cout, K) GEMM weights matching the packed activation layout.
    w1t = jnp.transpose(params["w1"], (0, 2, 3, 1)).reshape(Cint, 4 * Cin).astype(gemm_dtype)
    w2t = jnp.transpose(params["w2"], (0, 2, 3, 1)).reshape(Cint, 9 * Cint).astype(gemm_dtype)
    w3t = params["w3"].reshape(Cout, Cint).astype(gemm_dtype)

    body = functools.partial(_bottleneck_body, W2=W2, OFF=OFF, gemm_dtype=gemm_dtype)

    const = lambda n, r: (0, 0)
    main_spec = pl.BlockSpec((1, 4 * Cin, TM), lambda n, r: (n, 0, r))
    hw_spec = pl.BlockSpec((2, TM), lambda n, r: (0, r))
    w_specs = [
        pl.BlockSpec((Cint, 4 * Cin), const),                    # conv1 weight
        pl.BlockSpec((Cint, 1), const),                          # bn1 scale
        pl.BlockSpec((Cint, 1), const),                          # bn1 shift
        pl.BlockSpec((Cint, 9 * Cint), const),                   # conv2 weight
        pl.BlockSpec((Cint, 1), const),                          # bn2 scale
        pl.BlockSpec((Cint, 1), const),                          # bn2 shift
        pl.BlockSpec((Cout, Cint), const),                       # conv3 weight
        pl.BlockSpec((Cout, 1), const),                          # bn3 scale
        pl.BlockSpec((Cout, 1), const),                          # bn3 shift
    ]

    if tiled:
        top_spec = pl.BlockSpec(
            (1, 4 * Cin, W2),
            lambda n, r: (n, 0, jnp.maximum(r * TR - 1, 0)))
        bot_spec = pl.BlockSpec(
            (1, 4 * Cin, W2),
            lambda n, r: (n, 0, jnp.minimum(r * TR + TR, H2 - 1)))
        in_specs = [main_spec, hw_spec, top_spec, bot_spec] + w_specs
        operands = (xp, hw, xp, xp, w1t, s1, b1, w2t, s2, b2, w3t, s3, b3)

        def kernel(xp_r, hw_r, xt_r, xb_r, *rest):
            body(xp_r, hw_r, xt_r, xb_r, *rest)
    else:
        in_specs = [main_spec, hw_spec] + w_specs
        operands = (xp, hw, w1t, s1, b1, w2t, s2, b2, w3t, s3, b3)

        def kernel(xp_r, hw_r, *rest):
            body(xp_r, hw_r, None, None, *rest)

    out, idx = pl.pallas_call(
        kernel,
        grid=(N, n_tiles),
        in_specs=in_specs,
        out_specs=(pl.BlockSpec((1, Cout, TM), lambda n, r: (n, 0, r)),
                   pl.BlockSpec((1, Cin, TM), lambda n, r: (n, 0, r))),
        out_shape=(jax.ShapeDtypeStruct((N, Cout, M), out_dtype),
                   jax.ShapeDtypeStruct((N, Cin, M), jnp.int32)),
        scratch_shapes=[pltpu.VMEM((Cint, pad_len), gemm_dtype)],  # padded h1
        compiler_params=pltpu.CompilerParams(
            dimension_semantics=("parallel", "parallel"),
            vmem_limit_bytes=32 * 1024 * 1024),
    )(*operands)

    # Kernel outputs are channel-major / pixels-in-lanes; reshape back is free.
    return out.reshape(N, Cout, H2, W2), idx.reshape(N, Cin, H2, W2)


# --------------------------- pure-JAX reference --------------------------------
def reference_forward(x_nchw, params):
    eps = 1e-5
    x = jnp.transpose(x_nchw, (0, 2, 3, 1))
    dn = ("NHWC", "HWIO", "NHWC")
    prec = jax.lax.Precision.HIGHEST

    def conv(inp, w_oihw, stride, pad):
        w = jnp.transpose(w_oihw, (2, 3, 1, 0))
        return jax.lax.conv_general_dilated(inp, w, (stride, stride), pad,
                                            dimension_numbers=dn, precision=prec)

    def bn(h, g, b, m, v):
        return (h - m) / jnp.sqrt(v + eps) * g + b

    h = jax.nn.relu(bn(conv(x, params["w1"], 2, "VALID"),
                       params["g1"], params["be1"], params["m1"], params["v1"]))
    h = jax.nn.relu(bn(conv(h, params["w2"], 1, "SAME"),
                       params["g2"], params["be2"], params["m2"], params["v2"]))
    h = jax.nn.relu(bn(conv(h, params["w3"], 1, "VALID"),
                       params["g3"], params["be3"], params["m3"], params["v3"]))
    pooled = jax.lax.reduce_window(x, -jnp.inf, jax.lax.max,
                                   (1, 2, 2, 1), (1, 2, 2, 1), "VALID")
    main = jnp.concatenate(
        [pooled, jnp.zeros(pooled.shape[:3] + (h.shape[-1] - pooled.shape[-1],),
                           jnp.float32)], axis=-1)
    out = jax.nn.relu(main + h)
    return jnp.transpose(out, (0, 3, 1, 2))


def reference_pool_indices(x):
    """PyTorch MaxPool2d(2,2,return_indices=True) flat indices (h*W + w)."""
    xn = np.asarray(x)
    n, c, hh, ww = xn.shape
    h2, w2 = hh // 2, ww // 2
    v = xn.reshape(n, c, h2, 2, w2, 2)
    cand = np.stack([v[:, :, :, 0, :, 0], v[:, :, :, 0, :, 1],
                     v[:, :, :, 1, :, 0], v[:, :, :, 1, :, 1]], axis=-1)
    am = np.argmax(cand, axis=-1)
    rows = np.arange(h2).reshape(1, 1, h2, 1)
    cols = np.arange(w2).reshape(1, 1, 1, w2)
    return ((2 * rows + am // 2) * ww + (2 * cols + am % 2)).astype(np.int32)


def make_params(key, c_in, c_int, c_out):
    ks = jax.random.split(key, 15)
    f32 = jnp.float32

    def bn(i, c):
        return (1.0 + 0.1 * jax.random.normal(ks[i], (c,), f32),
                0.05 * jax.random.normal(ks[i + 1], (c,), f32),
                0.1 * jax.random.normal(ks[i + 2], (c,), f32),
                0.5 + jnp.abs(jax.random.normal(ks[i + 3], (c,), f32)))

    g1, be1, m1, v1 = bn(1, c_int)
    g2, be2, m2, v2 = bn(6, c_int)
    g3, be3, m3, v3 = bn(11, c_out)
    return {
        "w1": 0.2 * jax.random.normal(ks[0], (c_int, c_in, 2, 2), f32),
        "g1": g1, "be1": be1, "m1": m1, "v1": v1,
        "w2": 0.2 * jax.random.normal(ks[5], (c_int, c_int, 3, 3), f32),
        "g2": g2, "be2": be2, "m2": m2, "v2": v2,
        "w3": 0.2 * jax.random.normal(ks[10], (c_out, c_int, 1, 1), f32),
        "g3": g3, "be3": be3, "m3": m3, "v3": v3,
    }


if __name__ == "__main__":
    key = jax.random.PRNGKey(0)
    k_p1, k_x1, k_p2, k_x2 = jax.random.split(key, 4)

    # --- test 1: module-default small config (in=8, ratio=4 -> internal=2,
    #             out=16), f32, single row-tile (W2 < 128). -------------------
    N, Cin, H, W = 2, 8, 16, 16
    Cint, Cout = Cin // 4, 16
    params = make_params(k_p1, Cin, Cint, Cout)
    x = jax.random.normal(k_x1, (N, Cin, H, W), jnp.float32)

    out, idx = downsampling_bottleneck(x, params)
    out = jax.block_until_ready(out)
    idx = jax.block_until_ready(idx)
    assert out.shape == (N, Cout, H // 2, W // 2)
    assert idx.shape == (N, Cin, H // 2, W // 2)
    ref = reference_forward(x, params)
    assert np.allclose(np.asarray(out), np.asarray(ref), atol=1e-3, rtol=1e-3)
    assert (np.asarray(idx) == reference_pool_indices(x)).all()

    # --- test 2: larger config exercising the row-tiled halo path
    #             (H2=32, W2=128 -> 4 row tiles of 8 rows each), f32. ---------
    Nb, Cinb, Hb, Wb = 1, 16, 64, 256
    Cintb, Coutb = Cinb // 4, 64
    params_b = make_params(k_p2, Cinb, Cintb, Coutb)
    xb = jax.random.normal(k_x2, (Nb, Cinb, Hb, Wb), jnp.float32)

    out2, idx2 = downsampling_bottleneck(xb, params_b, tile_rows=8)
    out2 = jax.block_until_ready(out2)
    ref2 = reference_forward(xb, params_b)
    assert np.allclose(np.asarray(out2), np.asarray(ref2), atol=1e-3, rtol=1e-3)
    assert (np.asarray(idx2) == reference_pool_indices(xb)).all()

    # --- test 3: same config, bf16 output + bf16 GEMM operands (memory-bound
    #             fast path); pooling / indices stay exact f32 / int32. -------
    out3, idx3 = downsampling_bottleneck(xb, params_b, tile_rows=8,
                                         out_dtype=jnp.bfloat16,
                                         gemm_dtype=jnp.bfloat16)
    out3 = jax.block_until_ready(out3)
    assert out3.dtype == jnp.bfloat16
    assert np.allclose(np.asarray(out3.astype(jnp.float32)), np.asarray(ref2),
                       atol=8e-2, rtol=8e-2)
    assert (np.asarray(idx3) == reference_pool_indices(xb)).all()

    print("KERNEL_OK")
</pallas_src>

<mosaic_0001>
module attributes {stable_mosaic.version = 11 : i64} {
  func.func @kernel(%arg0: i32, %arg1: i32, %arg2: memref<1x32x64xf32, #tpu.memory_space<vmem>>, %arg3: memref<2x64xi32, #tpu.memory_space<vmem>>, %arg4: memref<2x32xf32, #tpu.memory_space<vmem>>, %arg5: memref<2x1xf32, #tpu.memory_space<vmem>>, %arg6: memref<2x1xf32, #tpu.memory_space<vmem>>, %arg7: memref<2x18xf32, #tpu.memory_space<vmem>>, %arg8: memref<2x1xf32, #tpu.memory_space<vmem>>, %arg9: memref<2x1xf32, #tpu.memory_space<vmem>>, %arg10: memref<16x2xf32, #tpu.memory_space<vmem>>, %arg11: memref<16x1xf32, #tpu.memory_space<vmem>>, %arg12: memref<16x1xf32, #tpu.memory_space<vmem>>, %arg13: memref<1x16x64xf32, #tpu.memory_space<vmem>>, %arg14: memref<1x8x64xi32, #tpu.memory_space<vmem>>, %arg15: memref<2x328xf32, #tpu.memory_space<vmem>>) attributes {dimension_semantics = [#tpu.dimension_semantics<parallel>, #tpu.dimension_semantics<parallel>], iteration_bounds = array<i64: 2, 1>, scalar_prefetch = 0 : i64, scratch_operands = 1 : i64, tpu.core_type = #tpu.core_type<tc>, window_params = [{transform_indices = @transform_0, window_bounds = array<i64: 1, 32, 64>}, {transform_indices = @transform_1, window_bounds = array<i64: 2, 64>}, {pipeline_mode = #tpu.pipeline_mode<synchronous>, transform_indices = @transform_2, window_bounds = array<i64: 2, 32>}, {pipeline_mode = #tpu.pipeline_mode<synchronous>, transform_indices = @transform_3, window_bounds = array<i64: 2, 1>}, {pipeline_mode = #tpu.pipeline_mode<synchronous>, transform_indices = @transform_4, window_bounds = array<i64: 2, 1>}, {pipeline_mode = #tpu.pipeline_mode<synchronous>, transform_indices = @transform_5, window_bounds = array<i64: 2, 18>}, {pipeline_mode = #tpu.pipeline_mode<synchronous>, transform_indices = @transform_6, window_bounds = array<i64: 2, 1>}, {pipeline_mode = #tpu.pipeline_mode<synchronous>, transform_indices = @transform_7, window_bounds = array<i64: 2, 1>}, {pipeline_mode = #tpu.pipeline_mode<synchronous>, transform_indices = @transform_8, window_bounds = array<i64: 16, 2>}, {pipeline_mode = #tpu.pipeline_mode<synchronous>, transform_indices = @transform_9, window_bounds = array<i64: 16, 1>}, {pipeline_mode = #tpu.pipeline_mode<synchronous>, transform_indices = @transform_10, window_bounds = array<i64: 16, 1>}, {transform_indices = @transform_11, window_bounds = array<i64: 1, 16, 64>}, {transform_indices = @transform_12, window_bounds = array<i64: 1, 8, 64>}]} {
    %c0 = arith.constant 0 : index
    %c0_0 = arith.constant 0 : index
    %c0_1 = arith.constant 0 : index
    %0 = vector.load %arg2[%c0, %c0_0, %c0_1] : memref<1x32x64xf32, #tpu.memory_space<vmem>>, vector<1x32x64xf32>
    %1 = vector.shape_cast %0 : vector<1x32x64xf32> to vector<32x64xf32>
    %c0_2 = arith.constant 0 : index
    %c0_3 = arith.constant 0 : index
    %2 = vector.load %arg3[%c0_2, %c0_3] : memref<2x64xi32, #tpu.memory_space<vmem>>, vector<1x64xi32>
    %c1 = arith.constant 1 : index
    %c0_4 = arith.constant 0 : index
    %3 = vector.load %arg3[%c1, %c0_4] : memref<2x64xi32, #tpu.memory_space<vmem>>, vector<1x64xi32>
    %c32_i32 = arith.constant 32 : i32
    %4 = vector.broadcast %c32_i32 : i32 to vector<1x64xi32>
    %5 = arith.muli %4, %2 : vector<1x64xi32>
    %c2_i32 = arith.constant 2 : i32
    %6 = vector.broadcast %c2_i32 : i32 to vector<1x64xi32>
    %7 = arith.muli %6, %3 : vector<1x64xi32>
    %8 = arith.addi %5, %7 : vector<1x64xi32>
    %c16_i32 = arith.constant 16 : i32
    %9 = vector.broadcast %c16_i32 : i32 to vector<1x64xi32>
    %10 = arith.addi %8, %9 : vector<1x64xi32>
    %c1_i32 = arith.constant 1 : i32
    %11 = vector.broadcast %c1_i32 : i32 to vector<1x64xi32>
    %12 = arith.cmpi sge, %3, %11 : vector<1x64xi32>
    %c6_i32 = arith.constant 6 : i32
    %13 = vector.broadcast %c6_i32 : i32 to vector<1x64xi32>
    %14 = arith.cmpi sle, %3, %13 : vector<1x64xi32>
    %15 = vector.extract_strided_slice %1 {offsets = [0, 0], sizes = [8, 64], strides = [1, 1]} : vector<32x64xf32> to vector<8x64xf32>
    %16 = vector.extract_strided_slice %1 {offsets = [8, 0], sizes = [8, 64], strides = [1, 1]} : vector<32x64xf32> to vector<8x64xf32>
    %17 = vector.extract_strided_slice %1 {offsets = [16, 0], sizes = [8, 64], strides = [1, 1]} : vector<32x64xf32> to vector<8x64xf32>
    %18 = vector.extract_strided_slice %1 {offsets = [24, 0], sizes = [8, 64], strides = [1, 1]} : vector<32x64xf32> to vector<8x64xf32>
    %19 = arith.maximumf %15, %16 : vector<8x64xf32>
    %20 = arith.cmpf ogt, %16, %15 : vector<8x64xf32>
    %c1_i32_5 = arith.constant 1 : i32
    %21 = vector.broadcast %c1_i32_5 : i32 to vector<1x64xi32>
    %22 = arith.addi %8, %21 : vector<1x64xi32>
    %23 = vector.shape_cast %22 : vector<1x64xi32> to vector<1x64xi32>
    %24 = vector.broadcast %23 : vector<1x64xi32> to vector<8x64xi32>
    %25 = vector.shape_cast %8 : vector<1x64xi32> to vector<1x64xi32>
    %26 = vector.broadcast %25 : vector<1x64xi32> to vector<8x64xi32>
    %27 = arith.select %20, %24, %26 : vector<8x64xi1>, vector<8x64xi32>
    %28 = arith.maximumf %17, %18 : vector<8x64xf32>
    %29 = arith.cmpf ogt, %18, %17 : vector<8x64xf32>
    %c1_i32_6 = arith.constant 1 : i32
    %30 = vector.broadcast %c1_i32_6 : i32 to vector<1x64xi32>
    %31 = arith.addi %10, %30 : vector<1x64xi32>
    %32 = vector.shape_cast %31 : vector<1x64xi32> to vector<1x64xi32>
    %33 = vector.broadcast %32 : vector<1x64xi32> to vector<8x64xi32>
    %34 = vector.shape_cast %10 : vector<1x64xi32> to vector<1x64xi32>
    %35 = vector.broadcast %34 : vector<1x64xi32> to vector<8x64xi32>
    %36 = arith.select %29, %33, %35 : vector<8x64xi1>, vector<8x64xi32>
    %37 = arith.maximumf %19, %28 : vector<8x64xf32>
    %38 = arith.cmpf ogt, %28, %19 : vector<8x64xf32>
    %39 = arith.select %38, %36, %27 : vector<8x64xi1>, vector<8x64xi32>
    %c0_7 = arith.constant 0 : index
    %c0_8 = arith.constant 0 : index
    %40 = vector.load %arg4[%c0_7, %c0_8] : memref<2x32xf32, #tpu.memory_space<vmem>>, vector<2x32xf32>
    %cst = arith.constant dense<0.000000e+00> : vector<2x64xf32>
    %41 = tpu.matmul %40, %1, %cst {dimension_numbers = #tpu.dot_dimension_numbers<[1], [0], [0], [1], [0, 0, 1, 1], [], []>} : vector<2x32xf32>, vector<32x64xf32>, vector<2x64xf32> -> vector<2x64xf32>
    %c0_9 = arith.constant 0 : index
    %c0_10 = arith.constant 0 : index
    %42 = vector.load %arg5[%c0_9, %c0_10] : memref<2x1xf32, #tpu.memory_space<vmem>>, vector<2x1xf32>
    %43 = vector.broadcast %42 : vector<2x1xf32> to vector<2x64xf32>
    %44 = arith.mulf %41, %43 : vector<2x64xf32>
    %c0_11 = arith.constant 0 : index
    %c0_12 = arith.constant 0 : index
    %45 = vector.load %arg6[%c0_11, %c0_12] : memref<2x1xf32, #tpu.memory_space<vmem>>, vector<2x1xf32>
    %46 = vector.broadcast %45 : vector<2x1xf32> to vector<2x64xf32>
    %47 = arith.addf %44, %46 : vector<2x64xf32>
    %cst_13 = arith.constant 0.000000e+00 : f32
    %48 = vector.broadcast %cst_13 : f32 to vector<2x64xf32>
    %49 = arith.maximumf %47, %48 : vector<2x64xf32>
    %c0_14 = arith.constant 0 : index
    %c128 = arith.constant 128 : index
    %50 = vector.load %arg15[%c0_14, %c128] : memref<2x328xf32, #tpu.memory_space<vmem>>, vector<2x64xf32>
    tpu.vector_store %arg15[%c0_14, %c128], %49 {strides = array<i32>} : memref<2x328xf32, #tpu.memory_space<vmem>>, vector<2x64xf32>,
    %cst_15 = arith.constant 0.000000e+00 : f32
    %51 = vector.broadcast %cst_15 : f32 to vector<2x8xf32>
    %c0_16 = arith.constant 0 : index
    %c120 = arith.constant 120 : index
    %52 = vector.load %arg15[%c0_16, %c120] : memref<2x328xf32, #tpu.memory_space<vmem>>, vector<2x8xf32>
    tpu.vector_store %arg15[%c0_16, %c120], %51 {strides = array<i32>} : memref<2x328xf32, #tpu.memory_space<vmem>>, vector<2x8xf32>,
    %c0_17 = arith.constant 0 : index
    %c192 = arith.constant 192 : index
    %53 = vector.load %arg15[%c0_17, %c192] : memref<2x328xf32, #tpu.memory_space<vmem>>, vector<2x8xf32>
    tpu.vector_store %arg15[%c0_17, %c192], %51 {strides = array<i32>} : memref<2x328xf32, #tpu.memory_space<vmem>>, vector<2x8xf32>,
    %c0_18 = arith.constant 0 : index
    %c119 = arith.constant 119 : index
    %54 = vector.load %arg15[%c0_18, %c119] : memref<2x328xf32, #tpu.memory_space<vmem>>, vector<2x64xf32>
    %c0_i32 = arith.constant 0 : i32
    %55 = arith.sitofp %c0_i32 : i32 to f32
    %56 = vector.shape_cast %12 : vector<1x64xi1> to vector<1x64xi1>
    %57 = vector.broadcast %56 : vector<1x64xi1> to vector<2x64xi1>
    %58 = vector.broadcast %55 : f32 to vector<2x64xf32>
    %59 = arith.select %57, %54, %58 : vector<2x64xi1>, vector<2x64xf32>
    %c0_19 = arith.constant 0 : index
    %c0_20 = arith.constant 0 : index
    %60 = vector.load %arg7[%c0_19, %c0_20] : memref<2x18xf32, #tpu.memory_space<vmem>>, vector<2x2xf32>
    %cst_21 = arith.constant dense<0.000000e+00> : vector<2x64xf32>
    %61 = tpu.matmul %60, %59, %cst_21 {dimension_numbers = #tpu.dot_dimension_numbers<[1], [0], [0], [1], [0, 0, 1, 1], [], []>} : vector<2x2xf32>, vector<2x64xf32>, vector<2x64xf32> -> vector<2x64xf32>
    %c0_22 = arith.constant 0 : index
    %c120_23 = arith.constant 120 : index
    %62 = vector.load %arg15[%c0_22, %c120_23] : memref<2x328xf32, #tpu.memory_space<vmem>>, vector<2x64xf32>
    %c0_24 = arith.constant 0 : index
    %c2 = arith.constant 2 : index
    %63 = vector.load %arg7[%c0_24, %c2] : memref<2x18xf32, #tpu.memory_space<vmem>>, vector<2x2xf32>
    %cst_25 = arith.constant dense<0.000000e+00> : vector<2x64xf32>
    %64 = tpu.matmul %63, %62, %cst_25 {dimension_numbers = #tpu.dot_dimension_numbers<[1], [0], [0], [1], [0, 0, 1, 1], [], []>} : vector<2x2xf32>, vector<2x64xf32>, vector<2x64xf32> -> vector<2x64xf32>
    %65 = arith.addf %61, %64 : vector<2x64xf32>
    %c0_26 = arith.constant 0 : index
    %c121 = arith.constant 121 : index
    %66 = vector.load %arg15[%c0_26, %c121] : memref<2x328xf32, #tpu.memory_space<vmem>>, vector<2x64xf32>
    %c0_i32_27 = arith.constant 0 : i32
    %67 = arith.sitofp %c0_i32_27 : i32 to f32
    %68 = vector.shape_cast %14 : vector<1x64xi1> to vector<1x64xi1>
    %69 = vector.broadcast %68 : vector<1x64xi1> to vector<2x64xi1>
    %70 = vector.broadcast %67 : f32 to vector<2x64xf32>
    %71 = arith.select %69, %66, %70 : vector<2x64xi1>, vector<2x64xf32>
    %c0_28 = arith.constant 0 : index
    %c4 = arith.constant 4 : index
    %72 = vector.load %arg7[%c0_28, %c4] : memref<2x18xf32, #tpu.memory_space<vmem>>, vector<2x2xf32>
    %cst_29 = arith.constant dense<0.000000e+00> : vector<2x64xf32>
    %73 = tpu.matmul %72, %71, %cst_29 {dimension_numbers = #tpu.dot_dimension_numbers<[1], [0], [0], [1], [0, 0, 1, 1], [], []>} : vector<2x2xf32>, vector<2x64xf32>, vector<2x64xf32> -> vector<2x64xf32>
    %74 = arith.addf %65, %73 : vector<2x64xf32>
    %c0_30 = arith.constant 0 : index
    %c127 = arith.constant 127 : index
    %75 = vector.load %arg15[%c0_30, %c127] : memref<2x328xf32, #tpu.memory_space<vmem>>, vector<2x64xf32>
    %c0_i32_31 = arith.constant 0 : i32
    %76 = arith.sitofp %c0_i32_31 : i32 to f32
    %77 = vector.shape_cast %12 : vector<1x64xi1> to vector<1x64xi1>
    %78 = vector.broadcast %77 : vector<1x64xi1> to vector<2x64xi1>
    %79 = vector.broadcast %76 : f32 to vector<2x64xf32>
    %80 = arith.select %78, %75, %79 : vector<2x64xi1>, vector<2x64xf32>
    %c0_32 = arith.constant 0 : index
    %c6 = arith.constant 6 : index
    %81 = vector.load %arg7[%c0_32, %c6] : memref<2x18xf32, #tpu.memory_space<vmem>>, vector<2x2xf32>
    %cst_33 = arith.constant dense<0.000000e+00> : vector<2x64xf32>
    %82 = tpu.matmul %81, %80, %cst_33 {dimension_numbers = #tpu.dot_dimension_numbers<[1], [0], [0], [1], [0, 0, 1, 1], [], []>} : vector<2x2xf32>, vector<2x64xf32>, vector<2x64xf32> -> vector<2x64xf32>
    %83 = arith.addf %74, %82 : vector<2x64xf32>
    %c0_34 = arith.constant 0 : index
    %c128_35 = arith.constant 128 : index
    %84 = vector.load %arg15[%c0_34, %c128_35] : memref<2x328xf32, #tpu.memory_space<vmem>>, vector<2x64xf32>
    %c0_36 = arith.constant 0 : index
    %c8 = arith.constant 8 : index
    %85 = vector.load %arg7[%c0_36, %c8] : memref<2x18xf32, #tpu.memory_space<vmem>>, vector<2x2xf32>
    %cst_37 = arith.constant dense<0.000000e+00> : vector<2x64xf32>
    %86 = tpu.matmul %85, %84, %cst_37 {dimension_numbers = #tpu.dot_dimension_numbers<[1], [0], [0], [1], [0, 0, 1, 1], [], []>} : vector<2x2xf32>, vector<2x64xf32>, vector<2x64xf32> -> vector<2x64xf32>
    %87 = arith.addf %83, %86 : vector<2x64xf32>
    %c0_38 = arith.constant 0 : index
    %c129 = arith.constant 129 : index
    %88 = vector.load %arg15[%c0_38, %c129] : memref<2x328xf32, #tpu.memory_space<vmem>>, vector<2x64xf32>
    %c0_i32_39 = arith.constant 0 : i32
    %89 = arith.sitofp %c0_i32_39 : i32 to f32
    %90 = vector.shape_cast %14 : vector<1x64xi1> to vector<1x64xi1>
    %91 = vector.broadcast %90 : vector<1x64xi1> to vector<2x64xi1>
    %92 = vector.broadcast %89 : f32 to vector<2x64xf32>
    %93 = arith.select %91, %88, %92 : vector<2x64xi1>, vector<2x64xf32>
    %c0_40 = arith.constant 0 : index
    %c10 = arith.constant 10 : index
    %94 = vector.load %arg7[%c0_40, %c10] : memref<2x18xf32, #tpu.memory_space<vmem>>, vector<2x2xf32>
    %cst_41 = arith.constant dense<0.000000e+00> : vector<2x64xf32>
    %95 = tpu.matmul %94, %93, %cst_41 {dimension_numbers = #tpu.dot_dimension_numbers<[1], [0], [0], [1], [0, 0, 1, 1], [], []>} : vector<2x2xf32>, vector<2x64xf32>, vector<2x64xf32> -> vector<2x64xf32>
    %96 = arith.addf %87, %95 : vector<2x64xf32>
    %c0_42 = arith.constant 0 : index
    %c135 = arith.constant 135 : index
    %97 = vector.load %arg15[%c0_42, %c135] : memref<2x328xf32, #tpu.memory_space<vmem>>, vector<2x64xf32>
    %c0_i32_43 = arith.constant 0 : i32
    %98 = arith.sitofp %c0_i32_43 : i32 to f32
    %99 = vector.shape_cast %12 : vector<1x64xi1> to vector<1x64xi1>
    %100 = vector.broadcast %99 : vector<1x64xi1> to vector<2x64xi1>
    %101 = vector.broadcast %98 : f32 to vector<2x64xf32>
    %102 = arith.select %100, %97, %101 : vector<2x64xi1>, vector<2x64xf32>
    %c0_44 = arith.constant 0 : index
    %c12 = arith.constant 12 : index
    %103 = vector.load %arg7[%c0_44, %c12] : memref<2x18xf32, #tpu.memory_space<vmem>>, vector<2x2xf32>
    %cst_45 = arith.constant dense<0.000000e+00> : vector<2x64xf32>
    %104 = tpu.matmul %103, %102, %cst_45 {dimension_numbers = #tpu.dot_dimension_numbers<[1], [0], [0], [1], [0, 0, 1, 1], [], []>} : vector<2x2xf32>, vector<2x64xf32>, vector<2x64xf32> -> vector<2x64xf32>
    %105 = arith.addf %96, %104 : vector<2x64xf32>
    %c0_46 = arith.constant 0 : index
    %c136 = arith.constant 136 : index
    %106 = vector.load %arg15[%c0_46, %c136] : memref<2x328xf32, #tpu.memory_space<vmem>>, vector<2x64xf32>
    %c0_47 = arith.constant 0 : index
    %c14 = arith.constant 14 : index
    %107 = vector.load %arg7[%c0_47, %c14] : memref<2x18xf32, #tpu.memory_space<vmem>>, vector<2x2xf32>
    %cst_48 = arith.constant dense<0.000000e+00> : vector<2x64xf32>
    %108 = tpu.matmul %107, %106, %cst_48 {dimension_numbers = #tpu.dot_dimension_numbers<[1], [0], [0], [1], [0, 0, 1, 1], [], []>} : vector<2x2xf32>, vector<2x64xf32>, vector<2x64xf32> -> vector<2x64xf32>
    %109 = arith.addf %105, %108 : vector<2x64xf32>
    %c0_49 = arith.constant 0 : index
    %c137 = arith.constant 137 : index
    %110 = vector.load %arg15[%c0_49, %c137] : memref<2x328xf32, #tpu.memory_space<vmem>>, vector<2x64xf32>
    %c0_i32_50 = arith.constant 0 : i32
    %111 = arith.sitofp %c0_i32_50 : i32 to f32
    %112 = vector.shape_cast %14 : vector<1x64xi1> to vector<1x64xi1>
    %113 = vector.broadcast %112 : vector<1x64xi1> to vector<2x64xi1>
    %114 = vector.broadcast %111 : f32 to vector<2x64xf32>
    %115 = arith.select %113, %110, %114 : vector<2x64xi1>, vector<2x64xf32>
    %c0_51 = arith.constant 0 : index
    %c16 = arith.constant 16 : index
    %116 = vector.load %arg7[%c0_51, %c16] : memref<2x18xf32, #tpu.memory_space<vmem>>, vector<2x2xf32>
    %cst_52 = arith.constant dense<0.000000e+00> : vector<2x64xf32>
    %117 = tpu.matmul %116, %115, %cst_52 {dimension_numbers = #tpu.dot_dimension_numbers<[1], [0], [0], [1], [0, 0, 1, 1], [], []>} : vector<2x2xf32>, vector<2x64xf32>, vector<2x64xf32> -> vector<2x64xf32>
    %118 = arith.addf %109, %117 : vector<2x64xf32>
    %c0_53 = arith.constant 0 : index
    %c0_54 = arith.constant 0 : index
    %119 = vector.load %arg8[%c0_53, %c0_54] : memref<2x1xf32, #tpu.memory_space<vmem>>, vector<2x1xf32>
    %120 = vector.broadcast %119 : vector<2x1xf32> to vector<2x64xf32>
    %121 = arith.mulf %118, %120 : vector<2x64xf32>
    %c0_55 = arith.constant 0 : index
    %c0_56 = arith.constant 0 : index
    %122 = vector.load %arg9[%c0_55, %c0_56] : memref<2x1xf32, #tpu.memory_space<vmem>>, vector<2x1xf32>
    %123 = vector.broadcast %122 : vector<2x1xf32> to vector<2x64xf32>
    %124 = arith.addf %121, %123 : vector<2x64xf32>
    %cst_57 = arith.constant 0.000000e+00 : f32
    %125 = vector.broadcast %cst_57 : f32 to vector<2x64xf32>
    %126 = arith.maximumf %124, %125 : vector<2x64xf32>
    %c0_58 = arith.constant 0 : index
    %c0_59 = arith.constant 0 : index
    %127 = vector.load %arg10[%c0_58, %c0_59] : memref<16x2xf32, #tpu.memory_space<vmem>>, vector<16x2xf32>
    %cst_60 = arith.constant dense<0.000000e+00> : vector<16x64xf32>
    %128 = tpu.matmul %127, %126, %cst_60 {dimension_numbers = #tpu.dot_dimension_numbers<[1], [0], [0], [1], [0, 0, 1, 1], [], []>} : vector<16x2xf32>, vector<2x64xf32>, vector<16x64xf32> -> vector<16x64xf32>
    %c0_61 = arith.constant 0 : index
    %c0_62 = arith.constant 0 : index
    %129 = vector.load %arg11[%c0_61, %c0_62] : memref<16x1xf32, #tpu.memory_space<vmem>>, vector<16x1xf32>
    %130 = vector.broadcast %129 : vector<16x1xf32> to vector<16x64xf32>
    %131 = arith.mulf %128, %130 : vector<16x64xf32>
    %c0_63 = arith.constant 0 : index
    %c0_64 = arith.constant 0 : index
    %132 = vector.load %arg12[%c0_63, %c0_64] : memref<16x1xf32, #tpu.memory_space<vmem>>, vector<16x1xf32>
    %133 = vector.broadcast %132 : vector<16x1xf32> to vector<16x64xf32>
    %134 = arith.addf %131, %133 : vector<16x64xf32>
    %cst_65 = arith.constant 0.000000e+00 : f32
    %135 = vector.broadcast %cst_65 : f32 to vector<16x64xf32>
    %136 = arith.maximumf %134, %135 : vector<16x64xf32>
    %137 = vector.extract_strided_slice %136 {offsets = [0, 0], sizes = [8, 64], strides = [1, 1]} : vector<16x64xf32> to vector<8x64xf32>
    %138 = arith.addf %137, %37 : vector<8x64xf32>
    %cst_66 = arith.constant 0.000000e+00 : f32
    %139 = vector.broadcast %cst_66 : f32 to vector<8x64xf32>
    %140 = arith.maximumf %138, %139 : vector<8x64xf32>
    %c0_67 = arith.constant 0 : index
    %c0_68 = arith.constant 0 : index
    %c0_69 = arith.constant 0 : index
    %141 = vector.load %arg13[%c0_67, %c0_68, %c0_69] : memref<1x16x64xf32, #tpu.memory_space<vmem>>, vector<1x8x64xf32>
    %142 = vector.shape_cast %141 : vector<1x8x64xf32> to vector<8x64xf32>
    %143 = vector.shape_cast %140 : vector<8x64xf32> to vector<1x8x64xf32>
    tpu.vector_store %arg13[%c0_67, %c0_68, %c0_69], %143 {strides = array<i32>} : memref<1x16x64xf32, #tpu.memory_space<vmem>>, vector<1x8x64xf32>,
    %144 = vector.extract_strided_slice %136 {offsets = [8, 0], sizes = [8, 64], strides = [1, 1]} : vector<16x64xf32> to vector<8x64xf32>
    %c0_70 = arith.constant 0 : index
    %c8_71 = arith.constant 8 : index
    %c0_72 = arith.constant 0 : index
    %145 = vector.load %arg13[%c0_70, %c8_71, %c0_72] : memref<1x16x64xf32, #tpu.memory_space<vmem>>, vector<1x8x64xf32>
    %146 = vector.shape_cast %145 : vector<1x8x64xf32> to vector<8x64xf32>
    %147 = vector.shape_cast %144 : vector<8x64xf32> to vector<1x8x64xf32>
    tpu.vector_store %arg13[%c0_70, %c8_71, %c0_72], %147 {strides = array<i32>} : memref<1x16x64xf32, #tpu.memory_space<vmem>>, vector<1x8x64xf32>,
    %c0_73 = arith.constant 0 : index
    %c0_74 = arith.constant 0 : index
    %c0_75 = arith.constant 0 : index
    %148 = vector.load %arg14[%c0_73, %c0_74, %c0_75] : memref<1x8x64xi32, #tpu.memory_space<vmem>>, vector<1x8x64xi32>
    %149 = vector.shape_cast %148 : vector<1x8x64xi32> to vector<8x64xi32>
    %150 = vector.shape_cast %39 : vector<8x64xi32> to vector<1x8x64xi32>
    tpu.vector_store %arg14[%c0_73, %c0_74, %c0_75], %150 {strides = array<i32>} : memref<1x8x64xi32, #tpu.memory_space<vmem>>, vector<1x8x64xi32>,
    return
  }
  func.func @transform_0(%arg0: i32, %arg1: i32) -> (i32, i32, i32) {
    %c0_i32 = arith.constant 0 : i32
    %c0_i32_0 = arith.constant 0 : i32
    return %arg0, %c0_i32, %arg1 : i32, i32, i32
  }
  func.func @transform_1(%arg0: i32, %arg1: i32) -> (i32, i32) {
    %c0_i32 = arith.constant 0 : i32
    %c0_i32_0 = arith.constant 0 : i32
    return %c0_i32, %arg1 : i32, i32
  }
  func.func @transform_2(%arg0: i32, %arg1: i32) -> (i32, i32) {
    %c0_i32 = arith.constant 0 : i32
    %c0_i32_0 = arith.constant 0 : i32
    %c0_i32_1 = arith.constant 0 : i32
    return %c0_i32, %c0_i32_0 : i32, i32
  }
  func.func @transform_3(%arg0: i32, %arg1: i32) -> (i32, i32) {
    %c0_i32 = arith.constant 0 : i32
    %c0_i32_0 = arith.constant 0 : i32
    %c0_i32_1 = arith.constant 0 : i32
    return %c0_i32, %c0_i32_0 : i32, i32
  }
  func.func @transform_4(%arg0: i32, %arg1: i32) -> (i32, i32) {
    %c0_i32 = arith.constant 0 : i32
    %c0_i32_0 = arith.constant 0 : i32
    %c0_i32_1 = arith.constant 0 : i32
    return %c0_i32, %c0_i32_0 : i32, i32
  }
  func.func @transform_5(%arg0: i32, %arg1: i32) -> (i32, i32) {
    %c0_i32 = arith.constant 0 : i32
    %c0_i32_0 = arith.constant 0 : i32
    %c0_i32_1 = arith.constant 0 : i32
    return %c0_i32, %c0_i32_0 : i32, i32
  }
  func.func @transform_6(%arg0: i32, %arg1: i32) -> (i32, i32) {
    %c0_i32 = arith.constant 0 : i32
    %c0_i32_0 = arith.constant 0 : i32
    %c0_i32_1 = arith.constant 0 : i32
    return %c0_i32, %c0_i32_0 : i32, i32
  }
  func.func @transform_7(%arg0: i32, %arg1: i32) -> (i32, i32) {
    %c0_i32 = arith.constant 0 : i32
    %c0_i32_0 = arith.constant 0 : i32
    %c0_i32_1 = arith.constant 0 : i32
    return %c0_i32, %c0_i32_0 : i32, i32
  }
  func.func @transform_8(%arg0: i32, %arg1: i32) -> (i32, i32) {
    %c0_i32 = arith.constant 0 : i32
    %c0_i32_0 = arith.constant 0 : i32
    %c0_i32_1 = arith.constant 0 : i32
    return %c0_i32, %c0_i32_0 : i32, i32
  }
  func.func @transform_9(%arg0: i32, %arg1: i32) -> (i32, i32) {
    %c0_i32 = arith.constant 0 : i32
    %c0_i32_0 = arith.constant 0 : i32
    %c0_i32_1 = arith.constant 0 : i32
    return %c0_i32, %c0_i32_0 : i32, i32
  }
  func.func @transform_10(%arg0: i32, %arg1: i32) -> (i32, i32) {
    %c0_i32 = arith.constant 0 : i32
    %c0_i32_0 = arith.constant 0 : i32
    %c0_i32_1 = arith.constant 0 : i32
    return %c0_i32, %c0_i32_0 : i32, i32
  }
  func.func @transform_11(%arg0: i32, %arg1: i32) -> (i32, i32, i32) {
    %c0_i32 = arith.constant 0 : i32
    %c0_i32_0 = arith.constant 0 : i32
    return %arg0, %c0_i32, %arg1 : i32, i32, i32
  }
  func.func @transform_12(%arg0: i32, %arg1: i32) -> (i32, i32, i32) {
    %c0_i32 = arith.constant 0 : i32
    %c0_i32_0 = arith.constant 0 : i32
    return %arg0, %c0_i32, %arg1 : i32, i32, i32
  }
}

</mosaic_0001>

<llo_original>
// kernel: tpu_custom_call.1
$region0: #{tpu_custom_call.1}
  #allocation0 [shape = 'u32[]', space=smem, size = 0x4, offset = 0x4, fixed_abs, tag = 'smem constant byte address 0x4 - core index']
  #allocation1 [shape = 'u32[144,128]{1,0:T(1,128)}', space=vmem, size = 0x12000, scoped, tag = 'internal scratch']
  #allocation2 [shape = 'f32[2,328]{1,0:T(2,128)}', space=vmem, size = 0xc00, scoped, tag = 'scratch operand']
  %s0 = inlined_call_operand.vmem [shape: f32[2,32,64], index: 0, kind: input, shape index: {}]
  %s1 = inlined_call_operand.vmem [shape: s32[2,64], index: 1, kind: input, shape index: {}]
  %s2 = inlined_call_operand.vmem [shape: f32[2,32], index: 2, kind: input, shape index: {}]
  %s3 = inlined_call_operand.vmem [shape: f32[2,1], index: 3, kind: input, shape index: {}]
  %s4 = inlined_call_operand.vmem [shape: f32[2,1], index: 4, kind: input, shape index: {}]
  %s5 = inlined_call_operand.vmem [shape: f32[2,18], index: 5, kind: input, shape index: {}]
  %s6 = inlined_call_operand.vmem [shape: f32[2,1], index: 6, kind: input, shape index: {}]
  %s7 = inlined_call_operand.vmem [shape: f32[2,1], index: 7, kind: input, shape index: {}]
  %s8 = inlined_call_operand.vmem [shape: f32[16,2], index: 8, kind: input, shape index: {}]
  %s9 = inlined_call_operand.vmem [shape: f32[16,1], index: 9, kind: input, shape index: {}]
  %s10 = inlined_call_operand.vmem [shape: f32[16,1], index: 10, kind: input, shape index: {}]
  %s11 = inlined_call_operand.hbm [shape: f32[2,16,64], index: 11, kind: output, shape index: {0}]
  %s12 = inlined_call_operand.hbm [shape: s32[2,8,64], index: 12, kind: output, shape index: {1}]
  %13 = xla_tuple %s11, %s12
  %s14 = sld [smem:[#allocation0]]
  $region85: #{tpu_custom_call.1} parent=0
    _
  %s16 = ssub.s32 1, %s14
  %s17 = scalar_select 0, %s16, %s14
  $region1: #{tpu_custom_call.1} parent=0
    #allocation3 [shape = 'u8[16384]{0}', space=vmem, size = 0x4000, scoped, tag = 'output window, operand 0']
    #allocation4 [shape = 's32[2]{0}', space=sflag, size = 0x8, scoped, tag = 'scoped memory for tpu_custom_call.1']
    #allocation5 [shape = 'u8[8192]{0}', space=vmem, size = 0x2000, scoped, tag = 'output window, operand 1']
    #allocation6 [shape = 's32[2]{0}', space=sflag, size = 0x8, scoped, tag = 'scoped memory for tpu_custom_call.1']
    %18 = vsyncpa [#allocation4], 0
    %s19 = scalar_lea.sflag [#allocation4], 1
    %20 = vsyncpa %s19, 0
    %21 = vsyncpa [#allocation6], 0
    %s22 = scalar_lea.sflag [#allocation6], 1
    %23 = vsyncpa %s22, 0
    loop: start=0, step=1, limit=4
    $region2: #{tpu_custom_call.1} parent=1 // loop_pre_header
      _
    $region3: #{tpu_custom_call.1} parent=1 // loop_header
      %s25 = sphi 0, %s29
      %p26 = scmp.ge.s32.totalorder %s25, 4
      %s32 = sphi 0, %s44
      %s33 = sphi 0, %s40
      %s34 = sphi 0, %s32
      %s35 = sphi 0, %s33
      %s36 = sphi 0, %s34
      %s37 = sphi 0, %s35
      %s49 = sphi 0, %s51
      %s52 = sphi 0, %s49
      %s53 = sphi 0, %s52
      %s69 = sphi 0, %s53
      %s75 = sphi 0, %s77
      %s78 = sphi 0, %s75
      %s79 = sphi 0, %s78
      %s95 = sphi 0, %s79
      %s99 = sphi 0, %s99
      %s101 = sphi 0, %s99
      %s102 = sphi 0, %s101
      %s116 = sphi 0, %s102
      %s120 = sphi 0, %s120
      %s122 = sphi 0, %s120
      %s123 = sphi 0, %s122
      %s137 = sphi 0, %s123
      %s141 = sphi 0, %s141
      %s143 = sphi 0, %s141
      %s144 = sphi 0, %s143
      %s158 = sphi 0, %s144
      %s162 = sphi 0, %s162
      %s164 = sphi 0, %s162
      %s165 = sphi 0, %s164
      %s179 = sphi 0, %s165
      %s183 = sphi 0, %s183
      %s185 = sphi 0, %s183
      %s186 = sphi 0, %s185
      %s200 = sphi 0, %s186
      %s204 = sphi 0, %s204
      %s206 = sphi 0, %s204
      %s207 = sphi 0, %s206
      %s221 = sphi 0, %s207
      %s225 = sphi 0, %s225
      %s227 = sphi 0, %s225
      %s228 = sphi 0, %s227
      %s242 = sphi 0, %s228
      %s246 = sphi 0, %s246
      %s248 = sphi 0, %s246
      %s249 = sphi 0, %s248
      %s263 = sphi 0, %s249
      %s267 = sphi 0, %s267
      %s269 = sphi 0, %s267
      %s270 = sphi 0, %s269
      %s284 = sphi 0, %s270
      %s292 = sphi 0, %s294
      %s295 = sphi 0, %s292
      %s296 = sphi 0, %s295
      %s312 = sphi 0, %s296
      %s320 = sphi 0, %s322
      %s323 = sphi 0, %s320
      %s324 = sphi 0, %s323
      %s340 = sphi 0, %s324
    $region4: #{tpu_custom_call.1} parent=1 // loop_header_branch
      %28 = sbr.rel (%p26) target = $region8
    $region5: #{tpu_custom_call.1} parent=1 // loop_body
      %s30 = ssub.s32 %s25, 1
      %s31 = ssub.s32 %s25, 2
      %s38 = sadd.s32 1, %s33
      %p39 = scmp.ge.s32.totalorder %s38, 1
      %s40 = scalar_select %p39, 0, %s38
      %s41 = sadd.s32 1, %s32
      %s42 = scalar_select %p39, %s41, %s32
      %p43 = scmp.ge.s32.totalorder %s42, 2
      %s44 = scalar_select %p43, 0, %s42
      %s45 = ssub.s32 %s32, %s44
      %s46 = ssub.s32 %s33, %s40
      %s47 = sor.u32 %s45, %s46
      %p48 = scmp.eq.s32.totalorder %s47, 0
      %s50 = sadd.s32 %s49, 1
      %s51 = scalar_select %p48, %s49, %s50
      %p54 = pneg %p48
      %p55 = scmp.eq.s32.totalorder %s25, 1
      %p56 = por %p54, %p55
      %p57 = scmp.ne.s32.totalorder %s49, %s52
      %p58 = scmp.eq.s32.totalorder %s25, 0
      %p59 = por %p57, %p58
      %p60 = scmp.ne.s32.totalorder %s49, %s52
      %p61 = scmp.eq.s32.totalorder %s30, 1
      %p62 = por %p60, %p61
      %p63 = scmp.ne.s32.totalorder %s52, %s53
      %p64 = scmp.eq.s32.totalorder %s30, 0
      %p65 = por %p63, %p64
      %p66 = scmp.ne.s32.totalorder %s52, %s53
      %p67 = scmp.eq.s32.totalorder %s31, 1
      %p68 = por %p66, %p67
      %p70 = scmp.ne.s32.totalorder %s53, %s69
      %p71 = scmp.eq.s32.totalorder %s31, 0
      %p72 = por %p70, %p71
      %s73 = ssub.s32 %s33, %s40
      %p74 = scmp.eq.s32.totalorder %s73, 0
      %s76 = sadd.s32 %s75, 1
      %s77 = scalar_select %p74, %s75, %s76
      %p80 = pneg %p74
      %p81 = scmp.eq.s32.totalorder %s25, 1
      %p82 = por %p80, %p81
      %p83 = scmp.ne.s32.totalorder %s75, %s78
      %p84 = scmp.eq.s32.totalorder %s25, 0
      %p85 = por %p83, %p84
      %p86 = scmp.ne.s32.totalorder %s75, %s78
      %p87 = scmp.eq.s32.totalorder %s30, 1
      %p88 = por %p86, %p87
      %p89 = scmp.ne.s32.totalorder %s78, %s79
      %p90 = scmp.eq.s32.totalorder %s30, 0
      %p91 = por %p89, %p90
      %p92 = scmp.ne.s32.totalorder %s78, %s79
      %p93 = scmp.eq.s32.totalorder %s31, 1
      %p94 = por %p92, %p93
      %p96 = scmp.ne.s32.totalorder %s79, %s95
      %p97 = scmp.eq.s32.totalorder %s31, 0
      %p98 = por %p96, %p97
      %s100 = sadd.s32 %s99, 1
      %p103 = scmp.eq.s32.totalorder %s25, 1
      %p104 = scmp.ne.s32.totalorder %s99, %s101
      %p105 = scmp.eq.s32.totalorder %s25, 0
      %p106 = por %p104, %p105
      %p107 = scmp.ne.s32.totalorder %s99, %s101
      %p108 = scmp.eq.s32.totalorder %s30, 1
      %p109 = por %p107, %p108
      %p110 = scmp.ne.s32.totalorder %s101, %s102
      %p111 = scmp.eq.s32.totalorder %s30, 0
      %p112 = por %p110, %p111
      %p113 = scmp.ne.s32.totalorder %s101, %s102
      %p114 = scmp.eq.s32.totalorder %s31, 1
      %p115 = por %p113, %p114
      %p117 = scmp.ne.s32.totalorder %s102, %s116
      %p118 = scmp.eq.s32.totalorder %s31, 0
      %p119 = por %p117, %p118
      %s121 = sadd.s32 %s120, 1
      %p124 = scmp.eq.s32.totalorder %s25, 1
      %p125 = scmp.ne.s32.totalorder %s120, %s122
      %p126 = scmp.eq.s32.totalorder %s25, 0
      %p127 = por %p125, %p126
      %p128 = scmp.ne.s32.totalorder %s120, %s122
      %p129 = scmp.eq.s32.totalorder %s30, 1
      %p130 = por %p128, %p129
      %p131 = scmp.ne.s32.totalorder %s122, %s123
      %p132 = scmp.eq.s32.totalorder %s30, 0
      %p133 = por %p131, %p132
      %p134 = scmp.ne.s32.totalorder %s122, %s123
      %p135 = scmp.eq.s32.totalorder %s31, 1
      %p136 = por %p134, %p135
      %p138 = scmp.ne.s32.totalorder %s123, %s137
      %p139 = scmp.eq.s32.totalorder %s31, 0
      %p140 = por %p138, %p139
      %s142 = sadd.s32 %s141, 1
      %p145 = scmp.eq.s32.totalorder %s25, 1
      %p146 = scmp.ne.s32.totalorder %s141, %s143
      %p147 = scmp.eq.s32.totalorder %s25, 0
      %p148 = por %p146, %p147
      %p149 = scmp.ne.s32.totalorder %s141, %s143
      %p150 = scmp.eq.s32.totalorder %s30, 1
      %p151 = por %p149, %p150
      %p152 = scmp.ne.s32.totalorder %s143, %s144
      %p153 = scmp.eq.s32.totalorder %s30, 0
      %p154 = por %p152, %p153
      %p155 = scmp.ne.s32.totalorder %s143, %s144
      %p156 = scmp.eq.s32.totalorder %s31, 1
      %p157 = por %p155, %p156
      %p159 = scmp.ne.s32.totalorder %s144, %s158
      %p160 = scmp.eq.s32.totalorder %s31, 0
      %p161 = por %p159, %p160
      %s163 = sadd.s32 %s162, 1
      %p166 = scmp.eq.s32.totalorder %s25, 1
      %p167 = scmp.ne.s32.totalorder %s162, %s164
      %p168 = scmp.eq.s32.totalorder %s25, 0
      %p169 = por %p167, %p168
      %p170 = scmp.ne.s32.totalorder %s162, %s164
      %p171 = scmp.eq.s32.totalorder %s30, 1
      %p172 = por %p170, %p171
      %p173 = scmp.ne.s32.totalorder %s164, %s165
      %p174 = scmp.eq.s32.totalorder %s30, 0
      %p175 = por %p173, %p174
      %p176 = scmp.ne.s32.totalorder %s164, %s165
      %p177 = scmp.eq.s32.totalorder %s31, 1
      %p178 = por %p176, %p177
      %p180 = scmp.ne.s32.totalorder %s165, %s179
      %p181 = scmp.eq.s32.totalorder %s31, 0
      %p182 = por %p180, %p181
      %s184 = sadd.s32 %s183, 1
      %p187 = scmp.eq.s32.totalorder %s25, 1
      %p188 = scmp.ne.s32.totalorder %s183, %s185
      %p189 = scmp.eq.s32.totalorder %s25, 0
      %p190 = por %p188, %p189
      %p191 = scmp.ne.s32.totalorder %s183, %s185
      %p192 = scmp.eq.s32.totalorder %s30, 1
      %p193 = por %p191, %p192
      %p194 = scmp.ne.s32.totalorder %s185, %s186
      %p195 = scmp.eq.s32.totalorder %s30, 0
      %p196 = por %p194, %p195
      %p197 = scmp.ne.s32.totalorder %s185, %s186
      %p198 = scmp.eq.s32.totalorder %s31, 1
      %p199 = por %p197, %p198
      %p201 = scmp.ne.s32.totalorder %s186, %s200
      %p202 = scmp.eq.s32.totalorder %s31, 0
      %p203 = por %p201, %p202
      %s205 = sadd.s32 %s204, 1
      %p208 = scmp.eq.s32.totalorder %s25, 1
      %p209 = scmp.ne.s32.totalorder %s204, %s206
      %p210 = scmp.eq.s32.totalorder %s25, 0
      %p211 = por %p209, %p210
      %p212 = scmp.ne.s32.totalorder %s204, %s206
      %p213 = scmp.eq.s32.totalorder %s30, 1
      %p214 = por %p212, %p213
      %p215 = scmp.ne.s32.totalorder %s206, %s207
      %p216 = scmp.eq.s32.totalorder %s30, 0
      %p217 = por %p215, %p216
      %p218 = scmp.ne.s32.totalorder %s206, %s207
      %p219 = scmp.eq.s32.totalorder %s31, 1
      %p220 = por %p218, %p219
      %p222 = scmp.ne.s32.totalorder %s207, %s221
      %p223 = scmp.eq.s32.totalorder %s31, 0
      %p224 = por %p222, %p223
      %s226 = sadd.s32 %s225, 1
      %p229 = scmp.eq.s32.totalorder %s25, 1
      %p230 = scmp.ne.s32.totalorder %s225, %s227
      %p231 = scmp.eq.s32.totalorder %s25, 0
      %p232 = por %p230, %p231
      %p233 = scmp.ne.s32.totalorder %s225, %s227
      %p234 = scmp.eq.s32.totalorder %s30, 1
      %p235 = por %p233, %p234
      %p236 = scmp.ne.s32.totalorder %s227, %s228
      %p237 = scmp.eq.s32.totalorder %s30, 0
      %p238 = por %p236, %p237
      %p239 = scmp.ne.s32.totalorder %s227, %s228
      %p240 = scmp.eq.s32.totalorder %s31, 1
      %p241 = por %p239, %p240
      %p243 = scmp.ne.s32.totalorder %s228, %s242
      %p244 = scmp.eq.s32.totalorder %s31, 0
      %p245 = por %p243, %p244
      %s247 = sadd.s32 %s246, 1
      %p250 = scmp.eq.s32.totalorder %s25, 1
      %p251 = scmp.ne.s32.totalorder %s246, %s248
      %p252 = scmp.eq.s32.totalorder %s25, 0
      %p253 = por %p251, %p252
      %p254 = scmp.ne.s32.totalorder %s246, %s248
      %p255 = scmp.eq.s32.totalorder %s30, 1
      %p256 = por %p254, %p255
      %p257 = scmp.ne.s32.totalorder %s248, %s249
      %p258 = scmp.eq.s32.totalorder %s30, 0
      %p259 = por %p257, %p258
      %p260 = scmp.ne.s32.totalorder %s248, %s249
      %p261 = scmp.eq.s32.totalorder %s31, 1
      %p262 = por %p260, %p261
      %p264 = scmp.ne.s32.totalorder %s249, %s263
      %p265 = scmp.eq.s32.totalorder %s31, 0
      %p266 = por %p264, %p265
      %s268 = sadd.s32 %s267, 1
      %p271 = scmp.eq.s32.totalorder %s25, 1
      %p272 = scmp.ne.s32.totalorder %s267, %s269
      %p273 = scmp.eq.s32.totalorder %s25, 0
      %p274 = por %p272, %p273
      %p275 = scmp.ne.s32.totalorder %s267, %s269
      %p276 = scmp.eq.s32.totalorder %s30, 1
      %p277 = por %p275, %p276
      %p278 = scmp.ne.s32.totalorder %s269, %s270
      %p279 = scmp.eq.s32.totalorder %s30, 0
      %p280 = por %p278, %p279
      %p281 = scmp.ne.s32.totalorder %s269, %s270
      %p282 = scmp.eq.s32.totalorder %s31, 1
      %p283 = por %p281, %p282
      %p285 = scmp.ne.s32.totalorder %s270, %s284
      %p286 = scmp.eq.s32.totalorder %s31, 0
      %p287 = por %p285, %p286
      %s288 = ssub.s32 %s32, %s44
      %s289 = ssub.s32 %s33, %s40
      %s290 = sor.u32 %s288, %s289
      %p291 = scmp.eq.s32.totalorder %s290, 0
      %s293 = sadd.s32 %s292, 1
      %s294 = scalar_select %p291, %s292, %s293
      %p297 = pneg %p291
      %p298 = scmp.eq.s32.totalorder %s25, 1
      %p299 = por %p297, %p298
      %p300 = scmp.ne.s32.totalorder %s292, %s295
      %p301 = scmp.eq.s32.totalorder %s25, 0
      %p302 = por %p300, %p301
      %p303 = scmp.ne.s32.totalorder %s292, %s295
      %p304 = scmp.eq.s32.totalorder %s30, 1
      %p305 = por %p303, %p304
      %p306 = scmp.ne.s32.totalorder %s295, %s296
      %p307 = scmp.eq.s32.totalorder %s30, 0
      %p308 = por %p306, %p307
      %p309 = scmp.ne.s32.totalorder %s295, %s296
      %p310 = scmp.eq.s32.totalorder %s31, 1
      %p311 = por %p309, %p310
      %p313 = scmp.ne.s32.totalorder %s296, %s312
      %p314 = scmp.eq.s32.totalorder %s31, 0
      %p315 = por %p313, %p314
      %s316 = ssub.s32 %s32, %s44
      %s317 = ssub.s32 %s33, %s40
      %s318 = sor.u32 %s316, %s317
      %p319 = scmp.eq.s32.totalorder %s318, 0
      %s321 = sadd.s32 %s320, 1
      %s322 = scalar_select %p319, %s320, %s321
      %p325 = pneg %p319
      %p326 = scmp.eq.s32.totalorder %s25, 1
      %p327 = por %p325, %p326
      %p328 = scmp.ne.s32.totalorder %s320, %s323
      %p329 = scmp.eq.s32.totalorder %s25, 0
      %p330 = por %p328, %p329
      %p331 = scmp.ne.s32.totalorder %s320, %s323
      %p332 = scmp.eq.s32.totalorder %s30, 1
      %p333 = por %p331, %p332
      %p334 = scmp.ne.s32.totalorder %s323, %s324
      %p335 = scmp.eq.s32.totalorder %s30, 0
      %p336 = por %p334, %p335
      %p337 = scmp.ne.s32.totalorder %s323, %s324
      %p338 = scmp.eq.s32.totalorder %s31, 1
      %p339 = por %p337, %p338
      %p341 = scmp.ne.s32.totalorder %s324, %s340
      %p342 = scmp.eq.s32.totalorder %s31, 0
      %p343 = por %p341, %p342
      %p344 = scmp.le.s32.totalorder 1, %s25
      %p345 = scmp.lt.s32.totalorder %s25, 3
      %p346 = pnand %p344, %p345
      %p347 = pneg %p346
      // Predicated region
      $region9: #{tpu_custom_call.1} parent=5 // pred_check
        _
      $region10: #{tpu_custom_call.1} parent=5 // pred_check_branch
        %349 = sbr.rel (%p346) target = $region12
      $region11: #{tpu_custom_call.1} parent=5 // pred_region
        %s350 = ssub.s32 %s25, 1
        // Predicated region
        $region13: #{tpu_custom_call.1} parent=11 // pred_check
          %p351 = pneg %p91
        $region14: #{tpu_custom_call.1} parent=11 // pred_check_branch
          %353 = sbr.rel (%p351) target = $region16
        $region15: #{tpu_custom_call.1} parent=11 // pred_region
          %p354 = scmp.lt.s32.totalorder %s35, 0
          %s355 = scalar_select %p354, %s35, 0
          %s356 = smul.addr %s355, 2
          %s357 = scalar_lea.vmem %s1, %s356
        $region16: #{tpu_custom_call.1} parent=11 // pred_fallthru
          _
        // Predicated region
        $region17: #{tpu_custom_call.1} parent=11 // pred_check
          %p358 = pneg %p112
        $region18: #{tpu_custom_call.1} parent=11 // pred_check_branch
          %360 = sbr.rel (%p358) target = $region20
        $region19: #{tpu_custom_call.1} parent=11 // pred_region
          _
        $region20: #{tpu_custom_call.1} parent=11 // pred_fallthru
          _
        // Predicated region
        $region21: #{tpu_custom_call.1} parent=11 // pred_check
          %p361 = pneg %p133
        $region22: #{tpu_custom_call.1} parent=11 // pred_check_branch
          %363 = sbr.rel (%p361) target = $region24
        $region23: #{tpu_custom_call.1} parent=11 // pred_region
          _
        $region24: #{tpu_custom_call.1} parent=11 // pred_fallthru
          _
        // Predicated region
        $region25: #{tpu_custom_call.1} parent=11 // pred_check
          %p364 = pneg %p154
        $region26: #{tpu_custom_call.1} parent=11 // pred_check_branch
          %366 = sbr.rel (%p364) target = $region28
        $region27: #{tpu_custom_call.1} parent=11 // pred_region
          _
        $region28: #{tpu_custom_call.1} parent=11 // pred_fallthru
          _
        // Predicated region
        $region29: #{tpu_custom_call.1} parent=11 // pred_check
          %p367 = pneg %p175
        $region30: #{tpu_custom_call.1} parent=11 // pred_check_branch
          %369 = sbr.rel (%p367) target = $region32
        $region31: #{tpu_custom_call.1} parent=11 // pred_region
          _
        $region32: #{tpu_custom_call.1} parent=11 // pred_fallthru
          _
        // Predicated region
        $region33: #{tpu_custom_call.1} parent=11 // pred_check
          %p370 = pneg %p196
        $region34: #{tpu_custom_call.1} parent=11 // pred_check_branch
          %372 = sbr.rel (%p370) target = $region36
        $region35: #{tpu_custom_call.1} parent=11 // pred_region
          _
        $region36: #{tpu_custom_call.1} parent=11 // pred_fallthru
          _
        // Predicated region
        $region37: #{tpu_custom_call.1} parent=11 // pred_check
          %p373 = pneg %p217
        $region38: #{tpu_custom_call.1} parent=11 // pred_check_branch
          %375 = sbr.rel (%p373) target = $region40
        $region39: #{tpu_custom_call.1} parent=11 // pred_region
          _
        $region40: #{tpu_custom_call.1} parent=11 // pred_fallthru
          _
        // Predicated region
        $region41: #{tpu_custom_call.1} parent=11 // pred_check
          %p376 = pneg %p238
        $region42: #{tpu_custom_call.1} parent=11 // pred_check_branch
          %378 = sbr.rel (%p376) target = $region44
        $region43: #{tpu_custom_call.1} parent=11 // pred_region
          _
        $region44: #{tpu_custom_call.1} parent=11 // pred_fallthru
          _
        // Predicated region
        $region45: #{tpu_custom_call.1} parent=11 // pred_check
          %p379 = pneg %p259
        $region46: #{tpu_custom_call.1} parent=11 // pred_check_branch
          %381 = sbr.rel (%p379) target = $region48
        $region47: #{tpu_custom_call.1} parent=11 // pred_region
          _
        $region48: #{tpu_custom_call.1} parent=11 // pred_fallthru
          _
        // Predicated region
        $region49: #{tpu_custom_call.1} parent=11 // pred_check
          %p382 = pneg %p280
        $region50: #{tpu_custom_call.1} parent=11 // pred_check_branch
          %384 = sbr.rel (%p382) target = $region52
        $region51: #{tpu_custom_call.1} parent=11 // pred_region
          _
        $region52: #{tpu_custom_call.1} parent=11 // pred_fallthru
          _
      $region12: #{tpu_custom_call.1} parent=5 // pred_fallthru
        _
      %p385 = scmp.lt.s32.totalorder %s25, 2
      // Predicated region
      $region53: #{tpu_custom_call.1} parent=5 // pred_check
        %p386 = pneg %p385
      $region54: #{tpu_custom_call.1} parent=5 // pred_check_branch
        %388 = sbr.rel (%p386) target = $region56
      $region55: #{tpu_custom_call.1} parent=5 // pred_region
        // Predicated region
        $region57: #{tpu_custom_call.1} parent=55 // pred_check
          %p389 = pneg %p59
        $region58: #{tpu_custom_call.1} parent=55 // pred_check_branch
          %391 = sbr.rel (%p389) target = $region60
        $region59: #{tpu_custom_call.1} parent=55 // pred_region
          %p392 = scmp.lt.s32.totalorder %s32, 1
          %s393 = scalar_select %p392, %s32, 1
          %p394 = scmp.lt.s32.totalorder %s33, 0
          %s395 = scalar_select %p394, %s33, 0
          %s396 = smul.addr %s393, 4
          %s397 = sadd.s32 %s395, %s396
          %s398 = smul.addr %s397, 8
          %s399 = scalar_lea.vmem %s0, %s398
        $region60: #{tpu_custom_call.1} parent=55 // pred_fallthru
          _
      $region56: #{tpu_custom_call.1} parent=5 // pred_fallthru
        _
      %p400 = scmp.le.s32.totalorder 1, %s25
      %p401 = scmp.lt.s32.totalorder %s25, 3
      %p402 = pnand %p400, %p401
      %p403 = pneg %p402
      // Predicated region
      $region61: #{tpu_custom_call.1} parent=5 // pred_check
        _
      $region62: #{tpu_custom_call.1} parent=5 // pred_check_branch
        %405 = sbr.rel (%p402) target = $region64
      $region63: #{tpu_custom_call.1} parent=5 // pred_region
        %s406 = ssub.s32 %s25, 1
        %p407 = scmp.lt.s32.totalorder %s34, 1
        %s408 = scalar_select %p407, %s34, 1
        %p409 = scmp.lt.s32.totalorder %s35, 0
        %s410 = scalar_select %p409, %s35, 0
        %s411 = smul.addr %s408, 4
        %s412 = sadd.s32 %s410, %s411
        %s413 = smul.addr %s412, 8
        %s414 = scalar_lea.vmem %s0, %s413
        %p415 = pneg %p65
        %p416 = pneg %p62
        %p417 = scmp.lt.s32.totalorder %s35, 0
        %s418 = scalar_select %p417, %s35, 0
        %s419 = smul.addr %s418, 2
        %s420 = scalar_lea.vmem %s1, %s419
        %p421 = pneg %p91
        %p422 = pneg %p88
        %p423 = pneg %p112
        %p424 = pneg %p109
        %p425 = pneg %p133
        %p426 = pneg %p130
        %p427 = pneg %p154
        %p428 = pneg %p151
        %p429 = pneg %p175
        %p430 = pneg %p172
        %p431 = pneg %p196
        %p432 = pneg %p193
        %p433 = pneg %p217
        %p434 = pneg %p214
        %p435 = pneg %p238
        %p436 = pneg %p235
        %p437 = pneg %p259
        %p438 = pneg %p256
        %p439 = pneg %p280
        %p440 = pneg %p277
        %p441 = pneg %p308
        %p442 = pneg %p305
        %s443 = sand.u32 %s295, 1
        %s444 = scalar_lea.sflag [#allocation4], %s443
        %s445 = sand.u32 %s295, 1
        %s446 = smul.addr %s445, 16
        %s447 = scalar_lea.vmem [#allocation3], %s446
        %p448 = pneg %p336
        %p449 = pneg %p333
        %s450 = sand.u32 %s323, 1
        %s451 = scalar_lea.sflag [#allocation6], %s450
        %s452 = sand.u32 %s323, 1
        %s453 = smul.addr %s452, 8
        %s454 = scalar_lea.vmem [#allocation5], %s453
        %p455 = scmp.lt.s32.totalorder %s34, 1
        %s456 = scalar_select %p455, %s34, 1
        %p457 = scmp.lt.s32.totalorder %s35, 0
        %s458 = scalar_select %p457, %s35, 0
        %s459 = smul.addr %s456, 4
        %s460 = sadd.s32 %s458, %s459
        %s461 = smul.addr %s460, 8
        %s462 = scalar_lea.vmem %s0, %s461
        %p463 = scmp.lt.s32.totalorder %s35, 0
        %s464 = scalar_select %p463, %s35, 0
        %s465 = smul.addr %s464, 2
        %s466 = scalar_lea.vmem %s1, %s465
        %v467 = vld [vmem:[%s462] sm:$0xff]
        %v468 = vld [vmem:[%s462 + $0x8] sm:$0xff]
        %v469 = vld [vmem:[%s462 + $0x10] sm:$0xff]
        %v470 = vld [vmem:[%s462 + $0x18] sm:$0xff]
        %v471 = vld [vmem:[%s466] sm:$0x1]
        %v472 = vld [vmem:[%s466 + $0x1] sm:$0x1]
        %v473 = vmul.u32 %v471, 32
        %v474 = vmul.u32 %v472, 2
        %v475 = vadd.s32 %v473, %v474
        %v476 = vadd.s32 %v475, 16
        %vm477 = vcmp.ge.s32.totalorder %v472, 1
        %vm478 = vcmp.le.s32.totalorder %v472, 6
        %v479 = vmax.f32 %v467, %v468
        %vm480 = vcmp.gt.f32.partialorder %v468, %v467
        %v481 = vadd.s32 %v475, 1
        %v482 = vlaneseq
        %v483 = vshrl.u32 %v482, 7
        %v484 = vsub.s32 0, %v483
        %v485 = vrot.slane %v481, %v484
        %v486 = vlaneseq
        %v487 = vshrl.u32 %v486, 7
        %v488 = vsub.s32 0, %v487
        %v489 = vrot.slane %v475, %v488
        %v490 = vsel %vm480, %v485, %v489
        %v491 = vmax.f32 %v469, %v470
        %vm492 = vcmp.gt.f32.partialorder %v470, %v469
        %v493 = vadd.s32 %v476, 1
        %v494 = vlaneseq
        %v495 = vshrl.u32 %v494, 7
        %v496 = vsub.s32 0, %v495
        %v497 = vrot.slane %v493, %v496
        %v498 = vlaneseq
        %v499 = vshrl.u32 %v498, 7
        %v500 = vsub.s32 0, %v499
        %v501 = vrot.slane %v476, %v500
        %v502 = vsel %vm492, %v497, %v501
        %v503 = vmax.f32 %v479, %v491
        %vm504 = vcmp.gt.f32.partialorder %v491, %v479
        %v505 = vsel %vm504, %v502, %v490
        %v506 = vld [vmem:[%s2] sm:$0x3]
        %vm507 = vcmask 261120
        %v509 = vsel %vm507, %v506, 0
        %511 = vmatprep.subr.mxu0 0.0
        %512 = vmatpush1.msra.mxu0 %v467
        %513 = vmatprep.subr.mxu0 0.0
        %514 = vmatpush1.msra.mxu0 %v468
        %515 = vmatprep.subr.mxu0 0.0
        %516 = vmatpush1.msra.mxu0 %v469
        %517 = vmatprep.subr.mxu0 0.0
        %518 = vmatpush1.msra.mxu0 %v470
        %519 = vmatprep.subr.mxu0 0.0
        %520 = vmatpush1.msra.mxu0 0.0
        %521 = vmatprep.subr.mxu0 0.0
        %522 = vmatpush1.msra.mxu0 0.0
        %523 = vmatprep.subr.mxu0 0.0
        %524 = vmatpush1.msra.mxu0 0.0
        %525 = vmatprep.subr.mxu0 0.0
        %526 = vmatpush1.msra.mxu0 0.0
        %527 = vmatprep.subr.mxu0 0.0
        %528 = vmatpush1.msra.mxu0 0.0
        %529 = vmatprep.subr.mxu0 0.0
        %530 = vmatpush1.msra.mxu0 0.0
        %531 = vmatprep.subr.mxu0 0.0
        %532 = vmatpush1.msra.mxu0 0.0
        %533 = vmatprep.subr.mxu0 0.0
        %534 = vmatpush1.msra.mxu0 0.0
        %535 = vmatprep.subr.mxu0 0.0
        %536 = vmatpush1.msra.mxu0 0.0
        %537 = vmatprep.subr.mxu0 0.0
        %538 = vmatpush1.msra.mxu0 0.0
        %539 = vmatprep.subr.mxu0 0.0
        %540 = vmatpush1.msra.mxu0 0.0
        %541 = vmatprep.subr.mxu0 0.0
        %542 = vmatpush1.msra.mxu0 0.0
        %543 = vmatprep.subr.mxu0 0.0
        %544 = vmatpush1.msra.mxu0 0.0
        %545 = vmatprep.subr.mxu0 0.0
        %546 = vmatpush1.msra.mxu0 0.0
        %547 = vmatprep.subr.mxu0 0.0
        %548 = vmatpush1.msra.mxu0 0.0
        %549 = vmatprep.subr.mxu0 0.0
        %550 = vmatpush1.msra.mxu0 0.0
        %551 = vmatprep.subr.mxu0 0.0
        %552 = vmatpush1.msra.mxu0 0.0
        %553 = vmatprep.subr.mxu0 0.0
        %554 = vmatpush1.msra.mxu0 0.0
        %555 = vmatprep.subr.mxu0 0.0
        %556 = vmatpush1.msra.mxu0 0.0
        %557 = vmatprep.subr.mxu0 0.0
        %558 = vmatpush1.msra.mxu0 0.0
        %559 = vmatprep.subr.mxu0 0.0
        %560 = vmatpush1.msra.mxu0 0.0
        %561 = vmatprep.subr.mxu0 0.0
        %562 = vmatpush1.msra.mxu0 0.0
        %563 = vmatprep.subr.mxu0 0.0
        %564 = vmatpush1.msra.mxu0 0.0
        %565 = vmatprep.subr.mxu0 0.0
        %566 = vmatpush1.msra.mxu0 0.0
        %567 = vmatprep.subr.mxu0 0.0
        %568 = vmatpush1.msra.mxu0 0.0
        %569 = vmatprep.subr.mxu0 0.0
        %570 = vmatpush1.msra.mxu0 0.0
        %571 = vmatprep.subr.mxu0 0.0
        %572 = vmatpush1.msra.mxu0 0.0
        %573 = vmatprep.subr.mxu0 0.0
        %574 = vmatpush1.msra.mxu0 0.0
        %575 = vmatprep.mubr.f32.mxu0 0.0
        %576 = vmatmul.mubr.f32.gmra.mrb[0].mxu0 %v509
        %v577 = vpop.f32.mrb[0].mxu0
        %v578 = vadd.f32 0.0, %v577
        %v579 = vpop.f32.mrb[0].mxu0
        %580 = vdwg.mxu0
        %v581 = vld [vmem:[%s3] sm:$0x3]
        %583 = vset.pattern.permute.xlu0 0
        %584 = vperm.xlu0 %583, %v581
        %v585 = vpop.permute.xlu0 %584
        %v587 = vmul.f32 %v578, %v585
        %v588 = vld [vmem:[%s4] sm:$0x3]
        %590 = vset.pattern.permute.xlu0 0
        %591 = vperm.xlu0 %590, %v588
        %v592 = vpop.permute.xlu0 %591
        %v594 = vadd.f32 %v587, %v592
        %v595 = vmax.f32 %v594, 0.0
        %vm596 = vcmask 517120
        %597 = vst.msk [vmem:[#allocation2 + $0x2] sm:$0x3] %vm596, %v595
        %vm598 = vcmask 1042368
        %599 = vst.msk [vmem:[#allocation2] sm:$0x3] %vm598, 0.0
        %vm600 = vcmask 583168
        %601 = vst.msk [vmem:[#allocation2 + $0x2] sm:$0x3] %vm600, 0.0
        %v602 = vld [vmem:[#allocation2] sm:$0xf]
        %v603 = vsel %vm477, 1, 0
        %v604 = vlaneseq
        %v605 = vshrl.u32 %v604, 7
        %v606 = vsub.s32 0, %v605
        %v607 = vrot.slane %v603, %v606
        %vm608 = vcmp.eq.s32.totalorder %v607, 1
        %v611 = vunpack.c.l.s4 1983009808
        %v612 = vunpack.c.0.s8 %v611
        %v613 = vlaneseq
        %v614 = vshrl.u32 %v613, 7
        %v615 = vsub.s32 %v612, %v614
        %v616 = vrot.slane %v602, %v615
        %v617 = vcombine.high %v616, %v616
        %618 = vrot.lane.b32.xlu0 %v616, 9
        %v619 = vpop.permute.xlu0 %618
        %620 = vrot.lane.b32.xlu0 %v617, 9
        %v621 = vpop.permute.xlu0 %620
        %vm622 = vcmask 72704
        %v623 = vsel %vm622, %v619, %v621
        %v625 = vsel %vm608, %v623, 0.0
        %v626 = vld [vmem:[%s5] sm:$0x3]
        %628 = vrot.lane.b32.xlu0 %v626, 126
        %v629 = vpop.permute.xlu0 %628
        %630 = vrot.lane.b32.xlu0 %v616, 8
        %v631 = vpop.permute.xlu0 %630
        %632 = vrot.lane.b32.xlu0 %v617, 8
        %v633 = vpop.permute.xlu0 %632
        %vm634 = vcmask 64512
        %v635 = vsel %vm634, %v631, %v633
        %vm636 = vcmask 15360
        %v637 = vsel %vm636, %v629, 0
        %vm639 = vcmask 1041408
        %v640 = vsel %vm639, %v635, 0
        %642 = vmatprep.subr.mxu0 0.0
        %643 = vmatpush1.msra.mxu0 %v640
        %644 = vmatprep.subr.mxu0 0.0
        %645 = vmatpush1.msra.mxu0 0.0
        %646 = vmatprep.subr.mxu0 0.0
        %647 = vmatpush1.msra.mxu0 0.0
        %648 = vmatprep.subr.mxu0 0.0
        %649 = vmatpush1.msra.mxu0 0.0
        %650 = vmatprep.subr.mxu0 0.0
        %651 = vmatpush1.msra.mxu0 0.0
        %652 = vmatprep.subr.mxu0 0.0
        %653 = vmatpush1.msra.mxu0 0.0
        %654 = vmatprep.subr.mxu0 0.0
        %655 = vmatpush1.msra.mxu0 0.0
        %656 = vmatprep.subr.mxu0 0.0
        %657 = vmatpush1.msra.mxu0 0.0
        %658 = vmatprep.subr.mxu0 0.0
        %659 = vmatpush1.msra.mxu0 0.0
        %660 = vmatprep.subr.mxu0 0.0
        %661 = vmatpush1.msra.mxu0 0.0
        %662 = vmatprep.subr.mxu0 0.0
        %663 = vmatpush1.msra.mxu0 0.0
        %664 = vmatprep.subr.mxu0 0.0
        %665 = vmatpush1.msra.mxu0 0.0
        %666 = vmatprep.subr.mxu0 0.0
        %667 = vmatpush1.msra.mxu0 0.0
        %668 = vmatprep.subr.mxu0 0.0
        %669 = vmatpush1.msra.mxu0 0.0
        %670 = vmatprep.subr.mxu0 0.0
        %671 = vmatpush1.msra.mxu0 0.0
        %672 = vmatprep.subr.mxu0 0.0
        %673 = vmatpush1.msra.mxu0 0.0
        %674 = vmatprep.subr.mxu0 0.0
        %675 = vmatpush1.msra.mxu0 0.0
        %676 = vmatprep.subr.mxu0 0.0
        %677 = vmatpush1.msra.mxu0 0.0
        %678 = vmatprep.subr.mxu0 0.0
        %679 = vmatpush1.msra.mxu0 0.0
        %680 = vmatprep.subr.mxu0 0.0
        %681 = vmatpush1.msra.mxu0 0.0
        %682 = vmatprep.subr.mxu0 0.0
        %683 = vmatpush1.msra.mxu0 0.0
        %684 = vmatprep.subr.mxu0 0.0
        %685 = vmatpush1.msra.mxu0 0.0
        %686 = vmatprep.subr.mxu0 0.0
        %687 = vmatpush1.msra.mxu0 0.0
        %688 = vmatprep.subr.mxu0 0.0
        %689 = vmatpush1.msra.mxu0 0.0
        %690 = vmatprep.subr.mxu0 0.0
        %691 = vmatpush1.msra.mxu0 0.0
        %692 = vmatprep.subr.mxu0 0.0
        %693 = vmatpush1.msra.mxu0 0.0
        %694 = vmatprep.subr.mxu0 0.0
        %695 = vmatpush1.msra.mxu0 0.0
        %696 = vmatprep.subr.mxu0 0.0
        %697 = vmatpush1.msra.mxu0 0.0
        %698 = vmatprep.subr.mxu0 0.0
        %699 = vmatpush1.msra.mxu0 0.0
        %700 = vmatprep.subr.mxu0 0.0
        %701 = vmatpush1.msra.mxu0 0.0
        %702 = vmatprep.subr.mxu0 0.0
        %703 = vmatpush1.msra.mxu0 0.0
        %704 = vmatprep.subr.mxu0 0.0
        %705 = vmatpush1.msra.mxu0 0.0
        %706 = vmatprep.mubr.f32.mxu0 0.0
        %707 = vmatmul.mubr.f32.gmra.mrb[0].mxu0 %v637
        %v708 = vpop.f32.mrb[0].mxu0
        %v709 = vadd.f32 0.0, %v708
        %v710 = vpop.f32.mrb[0].mxu0
        %711 = vdwg.mxu0
        %v712 = vsel %vm636, %v626, 0
        %v715 = vsel %vm639, %v625, 0
        %717 = vmatprep.subr.mxu0 0.0
        %718 = vmatpush1.msra.mxu0 %v715
        %719 = vmatprep.subr.mxu0 0.0
        %720 = vmatpush1.msra.mxu0 0.0
        %721 = vmatprep.subr.mxu0 0.0
        %722 = vmatpush1.msra.mxu0 0.0
        %723 = vmatprep.subr.mxu0 0.0
        %724 = vmatpush1.msra.mxu0 0.0
        %725 = vmatprep.subr.mxu0 0.0
        %726 = vmatpush1.msra.mxu0 0.0
        %727 = vmatprep.subr.mxu0 0.0
        %728 = vmatpush1.msra.mxu0 0.0
        %729 = vmatprep.subr.mxu0 0.0
        %730 = vmatpush1.msra.mxu0 0.0
        %731 = vmatprep.subr.mxu0 0.0
        %732 = vmatpush1.msra.mxu0 0.0
        %733 = vmatprep.subr.mxu0 0.0
        %734 = vmatpush1.msra.mxu0 0.0
        %735 = vmatprep.subr.mxu0 0.0
        %736 = vmatpush1.msra.mxu0 0.0
        %737 = vmatprep.subr.mxu0 0.0
        %738 = vmatpush1.msra.mxu0 0.0
        %739 = vmatprep.subr.mxu0 0.0
        %740 = vmatpush1.msra.mxu0 0.0
        %741 = vmatprep.subr.mxu0 0.0
        %742 = vmatpush1.msra.mxu0 0.0
        %743 = vmatprep.subr.mxu0 0.0
        %744 = vmatpush1.msra.mxu0 0.0
        %745 = vmatprep.subr.mxu0 0.0
        %746 = vmatpush1.msra.mxu0 0.0
        %747 = vmatprep.subr.mxu0 0.0
        %748 = vmatpush1.msra.mxu0 0.0
        %749 = vmatprep.subr.mxu0 0.0
        %750 = vmatpush1.msra.mxu0 0.0
        %751 = vmatprep.subr.mxu0 0.0
        %752 = vmatpush1.msra.mxu0 0.0
        %753 = vmatprep.subr.mxu0 0.0
        %754 = vmatpush1.msra.mxu0 0.0
        %755 = vmatprep.subr.mxu0 0.0
        %756 = vmatpush1.msra.mxu0 0.0
        %757 = vmatprep.subr.mxu0 0.0
        %758 = vmatpush1.msra.mxu0 0.0
        %759 = vmatprep.subr.mxu0 0.0
        %760 = vmatpush1.msra.mxu0 0.0
        %761 = vmatprep.subr.mxu0 0.0
        %762 = vmatpush1.msra.mxu0 0.0
        %763 = vmatprep.subr.mxu0 0.0
        %764 = vmatpush1.msra.mxu0 0.0
        %765 = vmatprep.subr.mxu0 0.0
        %766 = vmatpush1.msra.mxu0 0.0
        %767 = vmatprep.subr.mxu0 0.0
        %768 = vmatpush1.msra.mxu0 0.0
        %769 = vmatprep.subr.mxu0 0.0
        %770 = vmatpush1.msra.mxu0 0.0
        %771 = vmatprep.subr.mxu0 0.0
        %772 = vmatpush1.msra.mxu0 0.0
        %773 = vmatprep.subr.mxu0 0.0
        %774 = vmatpush1.msra.mxu0 0.0
        %775 = vmatprep.subr.mxu0 0.0
        %776 = vmatpush1.msra.mxu0 0.0
        %777 = vmatprep.subr.mxu0 0.0
        %778 = vmatpush1.msra.mxu0 0.0
        %779 = vmatprep.subr.mxu0 0.0
        %780 = vmatpush1.msra.mxu0 0.0
        %781 = vmatprep.mubr.f32.mxu0 0.0
        %782 = vmatmul.mubr.f32.gmra.mrb[0].mxu0 %v712
        %v783 = vpop.f32.mrb[0].mxu0
        %v784 = vadd.f32 %v709, %v783
        %v785 = vpop.f32.mrb[0].mxu0
        %786 = vdwg.mxu0
        %v787 = vld [vmem:[#allocation2] sm:$0xf]
        %v788 = vsel %vm478, 1, 0
        %v789 = vlaneseq
        %v790 = vshrl.u32 %v789, 7
        %v791 = vsub.s32 0, %v790
        %v792 = vrot.slane %v788, %v791
        %vm793 = vcmp.eq.s32.totalorder %v792, 1
        %v796 = vunpack.c.l.s4 1983009808
        %v797 = vunpack.c.0.s8 %v796
        %v798 = vlaneseq
        %v799 = vshrl.u32 %v798, 7
        %v800 = vsub.s32 %v797, %v799
        %v801 = vrot.slane %v787, %v800
        %v802 = vcombine.high %v801, %v801
        %803 = vrot.lane.b32.xlu0 %v801, 7
        %v804 = vpop.permute.xlu0 %803
        %805 = vrot.lane.b32.xlu0 %v802, 7
        %v806 = vpop.permute.xlu0 %805
        %vm807 = vcmask 56320
        %v808 = vsel %vm807, %v804, %v806
        %v810 = vsel %vm793, %v808, 0.0
        %v811 = vld [vmem:[%s5] sm:$0x3]
        %813 = vrot.lane.b32.xlu0 %v811, 124
        %v814 = vpop.permute.xlu0 %813
        %v815 = vsel %vm636, %v814, 0
        %v818 = vsel %vm639, %v810, 0
        %820 = vmatprep.subr.mxu0 0.0
        %821 = vmatpush1.msra.mxu0 %v818
        %822 = vmatprep.subr.mxu0 0.0
        %823 = vmatpush1.msra.mxu0 0.0
        %824 = vmatprep.subr.mxu0 0.0
        %825 = vmatpush1.msra.mxu0 0.0
        %826 = vmatprep.subr.mxu0 0.0
        %827 = vmatpush1.msra.mxu0 0.0
        %828 = vmatprep.subr.mxu0 0.0
        %829 = vmatpush1.msra.mxu0 0.0
        %830 = vmatprep.subr.mxu0 0.0
        %831 = vmatpush1.msra.mxu0 0.0
        %832 = vmatprep.subr.mxu0 0.0
        %833 = vmatpush1.msra.mxu0 0.0
        %834 = vmatprep.subr.mxu0 0.0
        %835 = vmatpush1.msra.mxu0 0.0
        %836 = vmatprep.subr.mxu0 0.0
        %837 = vmatpush1.msra.mxu0 0.0
        %838 = vmatprep.subr.mxu0 0.0
        %839 = vmatpush1.msra.mxu0 0.0
        %840 = vmatprep.subr.mxu0 0.0
        %841 = vmatpush1.msra.mxu0 0.0
        %842 = vmatprep.subr.mxu0 0.0
        %843 = vmatpush1.msra.mxu0 0.0
        %844 = vmatprep.subr.mxu0 0.0
        %845 = vmatpush1.msra.mxu0 0.0
        %846 = vmatprep.subr.mxu0 0.0
        %847 = vmatpush1.msra.mxu0 0.0
        %848 = vmatprep.subr.mxu0 0.0
        %849 = vmatpush1.msra.mxu0 0.0
        %850 = vmatprep.subr.mxu0 0.0
        %851 = vmatpush1.msra.mxu0 0.0
        %852 = vmatprep.subr.mxu0 0.0
        %853 = vmatpush1.msra.mxu0 0.0
        %854 = vmatprep.subr.mxu0 0.0
        %855 = vmatpush1.msra.mxu0 0.0
        %856 = vmatprep.subr.mxu0 0.0
        %857 = vmatpush1.msra.mxu0 0.0
        %858 = vmatprep.subr.mxu0 0.0
        %859 = vmatpush1.msra.mxu0 0.0
        %860 = vmatprep.subr.mxu0 0.0
        %861 = vmatpush1.msra.mxu0 0.0
        %862 = vmatprep.subr.mxu0 0.0
        %863 = vmatpush1.msra.mxu0 0.0
        %864 = vmatprep.subr.mxu0 0.0
        %865 = vmatpush1.msra.mxu0 0.0
        %866 = vmatprep.subr.mxu0 0.0
        %867 = vmatpush1.msra.mxu0 0.0
        %868 = vmatprep.subr.mxu0 0.0
        %869 = vmatpush1.msra.mxu0 0.0
        %870 = vmatprep.subr.mxu0 0.0
        %871 = vmatpush1.msra.mxu0 0.0
        %872 = vmatprep.subr.mxu0 0.0
        %873 = vmatpush1.msra.mxu0 0.0
        %874 = vmatprep.subr.mxu0 0.0
        %875 = vmatpush1.msra.mxu0 0.0
        %876 = vmatprep.subr.mxu0 0.0
        %877 = vmatpush1.msra.mxu0 0.0
        %878 = vmatprep.subr.mxu0 0.0
        %879 = vmatpush1.msra.mxu0 0.0
        %880 = vmatprep.subr.mxu0 0.0
        %881 = vmatpush1.msra.mxu0 0.0
        %882 = vmatprep.subr.mxu0 0.0
        %883 = vmatpush1.msra.mxu0 0.0
        %884 = vmatprep.mubr.f32.mxu0 0.0
        %885 = vmatmul.mubr.f32.gmra.mrb[0].mxu0 %v815
        %v886 = vpop.f32.mrb[0].mxu0
        %v887 = vadd.f32 0.0, %v886
        %v888 = vpop.f32.mrb[0].mxu0
        %889 = vdwg.mxu0
        %v890 = vadd.f32 %v784, %v887
        %v891 = vld [vmem:[#allocation2] sm:$0xf]
        %v894 = vunpack.c.l.s4 1983009808
        %v895 = vunpack.c.0.s8 %v894
        %v896 = vlaneseq
        %v897 = vshrl.u32 %v896, 7
        %v898 = vsub.s32 %v895, %v897
        %v899 = vrot.slane %v891, %v898
        %v900 = vcombine.high %v899, %v899
        %901 = vrot.lane.b32.xlu0 %v899, 1
        %v902 = vpop.permute.xlu0 %901
        %903 = vrot.lane.b32.xlu0 %v900, 1
        %v904 = vpop.permute.xlu0 %903
        %vm905 = vcmask 7168
        %v906 = vsel %vm905, %v902, %v904
        %v908 = vsel %vm608, %v906, 0.0
        %v909 = vld [vmem:[%s5] sm:$0x3]
        %911 = vrot.lane.b32.xlu0 %v909, 122
        %v912 = vpop.permute.xlu0 %911
        %v913 = vsel %vm636, %v912, 0
        %v916 = vsel %vm639, %v908, 0
        %918 = vmatprep.subr.mxu0 0.0
        %919 = vmatpush1.msra.mxu0 %v916
        %920 = vmatprep.subr.mxu0 0.0
        %921 = vmatpush1.msra.mxu0 0.0
        %922 = vmatprep.subr.mxu0 0.0
        %923 = vmatpush1.msra.mxu0 0.0
        %924 = vmatprep.subr.mxu0 0.0
        %925 = vmatpush1.msra.mxu0 0.0
        %926 = vmatprep.subr.mxu0 0.0
        %927 = vmatpush1.msra.mxu0 0.0
        %928 = vmatprep.subr.mxu0 0.0
        %929 = vmatpush1.msra.mxu0 0.0
        %930 = vmatprep.subr.mxu0 0.0
        %931 = vmatpush1.msra.mxu0 0.0
        %932 = vmatprep.subr.mxu0 0.0
        %933 = vmatpush1.msra.mxu0 0.0
        %934 = vmatprep.subr.mxu0 0.0
        %935 = vmatpush1.msra.mxu0 0.0
        %936 = vmatprep.subr.mxu0 0.0
        %937 = vmatpush1.msra.mxu0 0.0
        %938 = vmatprep.subr.mxu0 0.0
        %939 = vmatpush1.msra.mxu0 0.0
        %940 = vmatprep.subr.mxu0 0.0
        %941 = vmatpush1.msra.mxu0 0.0
        %942 = vmatprep.subr.mxu0 0.0
        %943 = vmatpush1.msra.mxu0 0.0
        %944 = vmatprep.subr.mxu0 0.0
        %945 = vmatpush1.msra.mxu0 0.0
        %946 = vmatprep.subr.mxu0 0.0
        %947 = vmatpush1.msra.mxu0 0.0
        %948 = vmatprep.subr.mxu0 0.0
        %949 = vmatpush1.msra.mxu0 0.0
        %950 = vmatprep.subr.mxu0 0.0
        %951 = vmatpush1.msra.mxu0 0.0
        %952 = vmatprep.subr.mxu0 0.0
        %953 = vmatpush1.msra.mxu0 0.0
        %954 = vmatprep.subr.mxu0 0.0
        %955 = vmatpush1.msra.mxu0 0.0
        %956 = vmatprep.subr.mxu0 0.0
        %957 = vmatpush1.msra.mxu0 0.0
        %958 = vmatprep.subr.mxu0 0.0
        %959 = vmatpush1.msra.mxu0 0.0
        %960 = vmatprep.subr.mxu0 0.0
        %961 = vmatpush1.msra.mxu0 0.0
        %962 = vmatprep.subr.mxu0 0.0
        %963 = vmatpush1.msra.mxu0 0.0
        %964 = vmatprep.subr.mxu0 0.0
        %965 = vmatpush1.msra.mxu0 0.0
        %966 = vmatprep.subr.mxu0 0.0
        %967 = vmatpush1.msra.mxu0 0.0
        %968 = vmatprep.subr.mxu0 0.0
        %969 = vmatpush1.msra.mxu0 0.0
        %970 = vmatprep.subr.mxu0 0.0
        %971 = vmatpush1.msra.mxu0 0.0
        %972 = vmatprep.subr.mxu0 0.0
        %973 = vmatpush1.msra.mxu0 0.0
        %974 = vmatprep.subr.mxu0 0.0
        %975 = vmatpush1.msra.mxu0 0.0
        %976 = vmatprep.subr.mxu0 0.0
        %977 = vmatpush1.msra.mxu0 0.0
        %978 = vmatprep.subr.mxu0 0.0
        %979 = vmatpush1.msra.mxu0 0.0
        %980 = vmatprep.subr.mxu0 0.0
        %981 = vmatpush1.msra.mxu0 0.0
        %982 = vmatprep.mubr.f32.mxu0 0.0
        %983 = vmatmul.mubr.f32.gmra.mrb[0].mxu0 %v913
        %v984 = vpop.f32.mrb[0].mxu0
        %v985 = vadd.f32 0.0, %v984
        %v986 = vpop.f32.mrb[0].mxu0
        %987 = vdwg.mxu0
        %v988 = vadd.f32 %v890, %v985
        %v989 = vld [vmem:[#allocation2 + $0x2] sm:$0x3]
        %990 = vrot.lane.b32.xlu0 %v909, 120
        %v991 = vpop.permute.xlu0 %990
        %v992 = vsel %vm636, %v991, 0
        %v995 = vsel %vm639, %v989, 0
        %997 = vmatprep.subr.mxu0 0.0
        %998 = vmatpush1.msra.mxu0 %v995
        %999 = vmatprep.subr.mxu0 0.0
        %1000 = vmatpush1.msra.mxu0 0.0
        %1001 = vmatprep.subr.mxu0 0.0
        %1002 = vmatpush1.msra.mxu0 0.0
        %1003 = vmatprep.subr.mxu0 0.0
        %1004 = vmatpush1.msra.mxu0 0.0
        %1005 = vmatprep.subr.mxu0 0.0
        %1006 = vmatpush1.msra.mxu0 0.0
        %1007 = vmatprep.subr.mxu0 0.0
        %1008 = vmatpush1.msra.mxu0 0.0
        %1009 = vmatprep.subr.mxu0 0.0
        %1010 = vmatpush1.msra.mxu0 0.0
        %1011 = vmatprep.subr.mxu0 0.0
        %1012 = vmatpush1.msra.mxu0 0.0
        %1013 = vmatprep.subr.mxu0 0.0
        %1014 = vmatpush1.msra.mxu0 0.0
        %1015 = vmatprep.subr.mxu0 0.0
        %1016 = vmatpush1.msra.mxu0 0.0
        %1017 = vmatprep.subr.mxu0 0.0
        %1018 = vmatpush1.msra.mxu0 0.0
        %1019 = vmatprep.subr.mxu0 0.0
        %1020 = vmatpush1.msra.mxu0 0.0
        %1021 = vmatprep.subr.mxu0 0.0
        %1022 = vmatpush1.msra.mxu0 0.0
        %1023 = vmatprep.subr.mxu0 0.0
        %1024 = vmatpush1.msra.mxu0 0.0
        %1025 = vmatprep.subr.mxu0 0.0
        %1026 = vmatpush1.msra.mxu0 0.0
        %1027 = vmatprep.subr.mxu0 0.0
        %1028 = vmatpush1.msra.mxu0 0.0
        %1029 = vmatprep.subr.mxu0 0.0
        %1030 = vmatpush1.msra.mxu0 0.0
        %1031 = vmatprep.subr.mxu0 0.0
        %1032 = vmatpush1.msra.mxu0 0.0
        %1033 = vmatprep.subr.mxu0 0.0
        %1034 = vmatpush1.msra.mxu0 0.0
        %1035 = vmatprep.subr.mxu0 0.0
        %1036 = vmatpush1.msra.mxu0 0.0
        %1037 = vmatprep.subr.mxu0 0.0
        %1038 = vmatpush1.msra.mxu0 0.0
        %1039 = vmatprep.subr.mxu0 0.0
        %1040 = vmatpush1.msra.mxu0 0.0
        %1041 = vmatprep.subr.mxu0 0.0
        %1042 = vmatpush1.msra.mxu0 0.0
        %1043 = vmatprep.subr.mxu0 0.0
        %1044 = vmatpush1.msra.mxu0 0.0
        %1045 = vmatprep.subr.mxu0 0.0
        %1046 = vmatpush1.msra.mxu0 0.0
        %1047 = vmatprep.subr.mxu0 0.0
        %1048 = vmatpush1.msra.mxu0 0.0
        %1049 = vmatprep.subr.mxu0 0.0
        %1050 = vmatpush1.msra.mxu0 0.0
        %1051 = vmatprep.subr.mxu0 0.0
        %1052 = vmatpush1.msra.mxu0 0.0
        %1053 = vmatprep.subr.mxu0 0.0
        %1054 = vmatpush1.msra.mxu0 0.0
        %1055 = vmatprep.subr.mxu0 0.0
        %1056 = vmatpush1.msra.mxu0 0.0
        %1057 = vmatprep.subr.mxu0 0.0
        %1058 = vmatpush1.msra.mxu0 0.0
        %1059 = vmatprep.subr.mxu0 0.0
        %1060 = vmatpush1.msra.mxu0 0.0
        %1061 = vmatprep.mubr.f32.mxu0 0.0
        %1062 = vmatmul.mubr.f32.gmra.mrb[0].mxu0 %v992
        %v1063 = vpop.f32.mrb[0].mxu0
        %v1064 = vadd.f32 0.0, %v1063
        %v1065 = vpop.f32.mrb[0].mxu0
        %1066 = vdwg.mxu0
        %v1067 = vadd.f32 %v988, %v1064
        %v1069 = vunpack.c.l.s4 1983009808
        %v1070 = vunpack.c.0.s8 %v1069
        %v1071 = vlaneseq
        %v1072 = vshrl.u32 %v1071, 7
        %v1073 = vsub.s32 %v1070, %v1072
        %v1074 = vrot.slane %v989, %v1073
        %1075 = vrot.lane.b32.xlu0 %v1074, 127
        %v1076 = vpop.permute.xlu0 %1075
        %v1078 = vsel %vm793, %v1076, 0.0
        %v1079 = vld [vmem:[%s5] sm:$0x3]
        %1081 = vrot.lane.b32.xlu0 %v1079, 118
        %v1082 = vpop.permute.xlu0 %1081
        %v1083 = vsel %vm636, %v1082, 0
        %v1086 = vsel %vm639, %v1078, 0
        %1088 = vmatprep.subr.mxu0 0.0
        %1089 = vmatpush1.msra.mxu0 %v1086
        %1090 = vmatprep.subr.mxu0 0.0
        %1091 = vmatpush1.msra.mxu0 0.0
        %1092 = vmatprep.subr.mxu0 0.0
        %1093 = vmatpush1.msra.mxu0 0.0
        %1094 = vmatprep.subr.mxu0 0.0
        %1095 = vmatpush1.msra.mxu0 0.0
        %1096 = vmatprep.subr.mxu0 0.0
        %1097 = vmatpush1.msra.mxu0 0.0
        %1098 = vmatprep.subr.mxu0 0.0
        %1099 = vmatpush1.msra.mxu0 0.0
        %1100 = vmatprep.subr.mxu0 0.0
        %1101 = vmatpush1.msra.mxu0 0.0
        %1102 = vmatprep.subr.mxu0 0.0
        %1103 = vmatpush1.msra.mxu0 0.0
        %1104 = vmatprep.subr.mxu0 0.0
        %1105 = vmatpush1.msra.mxu0 0.0
        %1106 = vmatprep.subr.mxu0 0.0
        %1107 = vmatpush1.msra.mxu0 0.0
        %1108 = vmatprep.subr.mxu0 0.0
        %1109 = vmatpush1.msra.mxu0 0.0
        %1110 = vmatprep.subr.mxu0 0.0
        %1111 = vmatpush1.msra.mxu0 0.0
        %1112 = vmatprep.subr.mxu0 0.0
        %1113 = vmatpush1.msra.mxu0 0.0
        %1114 = vmatprep.subr.mxu0 0.0
        %1115 = vmatpush1.msra.mxu0 0.0
        %1116 = vmatprep.subr.mxu0 0.0
        %1117 = vmatpush1.msra.mxu0 0.0
        %1118 = vmatprep.subr.mxu0 0.0
        %1119 = vmatpush1.msra.mxu0 0.0
        %1120 = vmatprep.subr.mxu0 0.0
        %1121 = vmatpush1.msra.mxu0 0.0
        %1122 = vmatprep.subr.mxu0 0.0
        %1123 = vmatpush1.msra.mxu0 0.0
        %1124 = vmatprep.subr.mxu0 0.0
        %1125 = vmatpush1.msra.mxu0 0.0
        %1126 = vmatprep.subr.mxu0 0.0
        %1127 = vmatpush1.msra.mxu0 0.0
        %1128 = vmatprep.subr.mxu0 0.0
        %1129 = vmatpush1.msra.mxu0 0.0
        %1130 = vmatprep.subr.mxu0 0.0
        %1131 = vmatpush1.msra.mxu0 0.0
        %1132 = vmatprep.subr.mxu0 0.0
        %1133 = vmatpush1.msra.mxu0 0.0
        %1134 = vmatprep.subr.mxu0 0.0
        %1135 = vmatpush1.msra.mxu0 0.0
        %1136 = vmatprep.subr.mxu0 0.0
        %1137 = vmatpush1.msra.mxu0 0.0
        %1138 = vmatprep.subr.mxu0 0.0
        %1139 = vmatpush1.msra.mxu0 0.0
        %1140 = vmatprep.subr.mxu0 0.0
        %1141 = vmatpush1.msra.mxu0 0.0
        %1142 = vmatprep.subr.mxu0 0.0
        %1143 = vmatpush1.msra.mxu0 0.0
        %1144 = vmatprep.subr.mxu0 0.0
        %1145 = vmatpush1.msra.mxu0 0.0
        %1146 = vmatprep.subr.mxu0 0.0
        %1147 = vmatpush1.msra.mxu0 0.0
        %1148 = vmatprep.subr.mxu0 0.0
        %1149 = vmatpush1.msra.mxu0 0.0
        %1150 = vmatprep.subr.mxu0 0.0
        %1151 = vmatpush1.msra.mxu0 0.0
        %1152 = vmatprep.mubr.f32.mxu0 0.0
        %1153 = vmatmul.mubr.f32.gmra.mrb[0].mxu0 %v1083
        %v1154 = vpop.f32.mrb[0].mxu0
        %v1155 = vadd.f32 0.0, %v1154
        %v1156 = vpop.f32.mrb[0].mxu0
        %1157 = vdwg.mxu0
        %v1158 = vadd.f32 %v1067, %v1155
        %v1159 = vld [vmem:[#allocation2 + $0x2] sm:$0x3]
        %v1162 = vunpack.c.l.s4 1983009808
        %v1163 = vunpack.c.0.s8 %v1162
        %v1164 = vlaneseq
        %v1165 = vshrl.u32 %v1164, 7
        %v1166 = vsub.s32 %v1163, %v1165
        %v1167 = vrot.slane %v1159, %v1166
        %1168 = vrot.lane.b32.xlu0 %v1167, 121
        %v1169 = vpop.permute.xlu0 %1168
        %v1171 = vsel %vm608, %v1169, 0.0
        %v1172 = vld [vmem:[%s5] sm:$0x3]
        %1174 = vrot.lane.b32.xlu0 %v1172, 116
        %v1175 = vpop.permute.xlu0 %1174
        %v1176 = vsel %vm636, %v1175, 0
        %v1179 = vsel %vm639, %v1171, 0
        %1181 = vmatprep.subr.mxu0 0.0
        %1182 = vmatpush1.msra.mxu0 %v1179
        %1183 = vmatprep.subr.mxu0 0.0
        %1184 = vmatpush1.msra.mxu0 0.0
        %1185 = vmatprep.subr.mxu0 0.0
        %1186 = vmatpush1.msra.mxu0 0.0
        %1187 = vmatprep.subr.mxu0 0.0
        %1188 = vmatpush1.msra.mxu0 0.0
        %1189 = vmatprep.subr.mxu0 0.0
        %1190 = vmatpush1.msra.mxu0 0.0
        %1191 = vmatprep.subr.mxu0 0.0
        %1192 = vmatpush1.msra.mxu0 0.0
        %1193 = vmatprep.subr.mxu0 0.0
        %1194 = vmatpush1.msra.mxu0 0.0
        %1195 = vmatprep.subr.mxu0 0.0
        %1196 = vmatpush1.msra.mxu0 0.0
        %1197 = vmatprep.subr.mxu0 0.0
        %1198 = vmatpush1.msra.mxu0 0.0
        %1199 = vmatprep.subr.mxu0 0.0
        %1200 = vmatpush1.msra.mxu0 0.0
        %1201 = vmatprep.subr.mxu0 0.0
        %1202 = vmatpush1.msra.mxu0 0.0
        %1203 = vmatprep.subr.mxu0 0.0
        %1204 = vmatpush1.msra.mxu0 0.0
        %1205 = vmatprep.subr.mxu0 0.0
        %1206 = vmatpush1.msra.mxu0 0.0
        %1207 = vmatprep.subr.mxu0 0.0
        %1208 = vmatpush1.msra.mxu0 0.0
        %1209 = vmatprep.subr.mxu0 0.0
        %1210 = vmatpush1.msra.mxu0 0.0
        %1211 = vmatprep.subr.mxu0 0.0
        %1212 = vmatpush1.msra.mxu0 0.0
        %1213 = vmatprep.subr.mxu0 0.0
        %1214 = vmatpush1.msra.mxu0 0.0
        %1215 = vmatprep.subr.mxu0 0.0
        %1216 = vmatpush1.msra.mxu0 0.0
        %1217 = vmatprep.subr.mxu0 0.0
        %1218 = vmatpush1.msra.mxu0 0.0
        %1219 = vmatprep.subr.mxu0 0.0
        %1220 = vmatpush1.msra.mxu0 0.0
        %1221 = vmatprep.subr.mxu0 0.0
        %1222 = vmatpush1.msra.mxu0 0.0
        %1223 = vmatprep.subr.mxu0 0.0
        %1224 = vmatpush1.msra.mxu0 0.0
        %1225 = vmatprep.subr.mxu0 0.0
        %1226 = vmatpush1.msra.mxu0 0.0
        %1227 = vmatprep.subr.mxu0 0.0
        %1228 = vmatpush1.msra.mxu0 0.0
        %1229 = vmatprep.subr.mxu0 0.0
        %1230 = vmatpush1.msra.mxu0 0.0
        %1231 = vmatprep.subr.mxu0 0.0
        %1232 = vmatpush1.msra.mxu0 0.0
        %1233 = vmatprep.subr.mxu0 0.0
        %1234 = vmatpush1.msra.mxu0 0.0
        %1235 = vmatprep.subr.mxu0 0.0
        %1236 = vmatpush1.msra.mxu0 0.0
        %1237 = vmatprep.subr.mxu0 0.0
        %1238 = vmatpush1.msra.mxu0 0.0
        %1239 = vmatprep.subr.mxu0 0.0
        %1240 = vmatpush1.msra.mxu0 0.0
        %1241 = vmatprep.subr.mxu0 0.0
        %1242 = vmatpush1.msra.mxu0 0.0
        %1243 = vmatprep.subr.mxu0 0.0
        %1244 = vmatpush1.msra.mxu0 0.0
        %1245 = vmatprep.mubr.f32.mxu0 0.0
        %1246 = vmatmul.mubr.f32.gmra.mrb[0].mxu0 %v1176
        %v1247 = vpop.f32.mrb[0].mxu0
        %v1248 = vadd.f32 0.0, %v1247
        %v1249 = vpop.f32.mrb[0].mxu0
        %1250 = vdwg.mxu0
        %v1251 = vadd.f32 %v1158, %v1248
        %v1252 = vld [vmem:[#allocation2 + $0x2] sm:$0x3]
        %1253 = vrot.lane.b32.xlu0 %v1172, 114
        %v1254 = vpop.permute.xlu0 %1253
        %v1257 = vunpack.c.l.s4 1983009808
        %v1258 = vunpack.c.0.s8 %v1257
        %v1259 = vlaneseq
        %v1260 = vshrl.u32 %v1259, 7
        %v1261 = vsub.s32 %v1258, %v1260
        %v1262 = vrot.slane %v1252, %v1261
        %1263 = vrot.lane.b32.xlu0 %v1262, 120
        %v1264 = vpop.permute.xlu0 %1263
        %v1265 = vsel %vm636, %v1254, 0
        %v1267 = vsel %vm639, %v1264, 0
        %1269 = vmatprep.subr.mxu0 0.0
        %1270 = vmatpush1.msra.mxu0 %v1267
        %1271 = vmatprep.subr.mxu0 0.0
        %1272 = vmatpush1.msra.mxu0 0.0
        %1273 = vmatprep.subr.mxu0 0.0
        %1274 = vmatpush1.msra.mxu0 0.0
        %1275 = vmatprep.subr.mxu0 0.0
        %1276 = vmatpush1.msra.mxu0 0.0
        %1277 = vmatprep.subr.mxu0 0.0
        %1278 = vmatpush1.msra.mxu0 0.0
        %1279 = vmatprep.subr.mxu0 0.0
        %1280 = vmatpush1.msra.mxu0 0.0
        %1281 = vmatprep.subr.mxu0 0.0
        %1282 = vmatpush1.msra.mxu0 0.0
        %1283 = vmatprep.subr.mxu0 0.0
        %1284 = vmatpush1.msra.mxu0 0.0
        %1285 = vmatprep.subr.mxu0 0.0
        %1286 = vmatpush1.msra.mxu0 0.0
        %1287 = vmatprep.subr.mxu0 0.0
        %1288 = vmatpush1.msra.mxu0 0.0
        %1289 = vmatprep.subr.mxu0 0.0
        %1290 = vmatpush1.msra.mxu0 0.0
        %1291 = vmatprep.subr.mxu0 0.0
        %1292 = vmatpush1.msra.mxu0 0.0
        %1293 = vmatprep.subr.mxu0 0.0
        %1294 = vmatpush1.msra.mxu0 0.0
        %1295 = vmatprep.subr.mxu0 0.0
        %1296 = vmatpush1.msra.mxu0 0.0
        %1297 = vmatprep.subr.mxu0 0.0
        %1298 = vmatpush1.msra.mxu0 0.0
        %1299 = vmatprep.subr.mxu0 0.0
        %1300 = vmatpush1.msra.mxu0 0.0
        %1301 = vmatprep.subr.mxu0 0.0
        %1302 = vmatpush1.msra.mxu0 0.0
        %1303 = vmatprep.subr.mxu0 0.0
        %1304 = vmatpush1.msra.mxu0 0.0
        %1305 = vmatprep.subr.mxu0 0.0
        %1306 = vmatpush1.msra.mxu0 0.0
        %1307 = vmatprep.subr.mxu0 0.0
        %1308 = vmatpush1.msra.mxu0 0.0
        %1309 = vmatprep.subr.mxu0 0.0
        %1310 = vmatpush1.msra.mxu0 0.0
        %1311 = vmatprep.subr.mxu0 0.0
        %1312 = vmatpush1.msra.mxu0 0.0
        %1313 = vmatprep.subr.mxu0 0.0
        %1314 = vmatpush1.msra.mxu0 0.0
        %1315 = vmatprep.subr.mxu0 0.0
        %1316 = vmatpush1.msra.mxu0 0.0
        %1317 = vmatprep.subr.mxu0 0.0
        %1318 = vmatpush1.msra.mxu0 0.0
        %1319 = vmatprep.subr.mxu0 0.0
        %1320 = vmatpush1.msra.mxu0 0.0
        %1321 = vmatprep.subr.mxu0 0.0
        %1322 = vmatpush1.msra.mxu0 0.0
        %1323 = vmatprep.subr.mxu0 0.0
        %1324 = vmatpush1.msra.mxu0 0.0
        %1325 = vmatprep.subr.mxu0 0.0
        %1326 = vmatpush1.msra.mxu0 0.0
        %1327 = vmatprep.subr.mxu0 0.0
        %1328 = vmatpush1.msra.mxu0 0.0
        %1329 = vmatprep.subr.mxu0 0.0
        %1330 = vmatpush1.msra.mxu0 0.0
        %1331 = vmatprep.subr.mxu0 0.0
        %1332 = vmatpush1.msra.mxu0 0.0
        %1333 = vmatprep.mubr.f32.mxu0 0.0
        %1334 = vmatmul.mubr.f32.gmra.mrb[0].mxu0 %v1265
        %v1335 = vpop.f32.mrb[0].mxu0
        %v1336 = vadd.f32 0.0, %v1335
        %v1337 = vpop.f32.mrb[0].mxu0
        %1338 = vdwg.mxu0
        %v1339 = vadd.f32 %v1251, %v1336
        %v1340 = vld [vmem:[#allocation2 + $0x2] sm:$0x3]
        %v1343 = vunpack.c.l.s4 1983009808
        %v1344 = vunpack.c.0.s8 %v1343
        %v1345 = vlaneseq
        %v1346 = vshrl.u32 %v1345, 7
        %v1347 = vsub.s32 %v1344, %v1346
        %v1348 = vrot.slane %v1340, %v1347
        %1349 = vrot.lane.b32.xlu0 %v1348, 119
        %v1350 = vpop.permute.xlu0 %1349
        %v1352 = vsel %vm793, %v1350, 0.0
        %v1353 = vld [vmem:[%s5] sm:$0x3]
        %1355 = vrot.lane.b32.xlu0 %v1353, 112
        %v1356 = vpop.permute.xlu0 %1355
        %v1357 = vsel %vm636, %v1356, 0
        %v1360 = vsel %vm639, %v1352, 0
        %1362 = vmatprep.subr.mxu0 0.0
        %1363 = vmatpush1.msra.mxu0 %v1360
        %1364 = vmatprep.subr.mxu0 0.0
        %1365 = vmatpush1.msra.mxu0 0.0
        %1366 = vmatprep.subr.mxu0 0.0
        %1367 = vmatpush1.msra.mxu0 0.0
        %1368 = vmatprep.subr.mxu0 0.0
        %1369 = vmatpush1.msra.mxu0 0.0
        %1370 = vmatprep.subr.mxu0 0.0
        %1371 = vmatpush1.msra.mxu0 0.0
        %1372 = vmatprep.subr.mxu0 0.0
        %1373 = vmatpush1.msra.mxu0 0.0
        %1374 = vmatprep.subr.mxu0 0.0
        %1375 = vmatpush1.msra.mxu0 0.0
        %1376 = vmatprep.subr.mxu0 0.0
        %1377 = vmatpush1.msra.mxu0 0.0
        %1378 = vmatprep.subr.mxu0 0.0
        %1379 = vmatpush1.msra.mxu0 0.0
        %1380 = vmatprep.subr.mxu0 0.0
        %1381 = vmatpush1.msra.mxu0 0.0
        %1382 = vmatprep.subr.mxu0 0.0
        %1383 = vmatpush1.msra.mxu0 0.0
        %1384 = vmatprep.subr.mxu0 0.0
        %1385 = vmatpush1.msra.mxu0 0.0
        %1386 = vmatprep.subr.mxu0 0.0
        %1387 = vmatpush1.msra.mxu0 0.0
        %1388 = vmatprep.subr.mxu0 0.0
        %1389 = vmatpush1.msra.mxu0 0.0
        %1390 = vmatprep.subr.mxu0 0.0
        %1391 = vmatpush1.msra.mxu0 0.0
        %1392 = vmatprep.subr.mxu0 0.0
        %1393 = vmatpush1.msra.mxu0 0.0
        %1394 = vmatprep.subr.mxu0 0.0
        %1395 = vmatpush1.msra.mxu0 0.0
        %1396 = vmatprep.subr.mxu0 0.0
        %1397 = vmatpush1.msra.mxu0 0.0
        %1398 = vmatprep.subr.mxu0 0.0
        %1399 = vmatpush1.msra.mxu0 0.0
        %1400 = vmatprep.subr.mxu0 0.0
        %1401 = vmatpush1.msra.mxu0 0.0
        %1402 = vmatprep.subr.mxu0 0.0
        %1403 = vmatpush1.msra.mxu0 0.0
        %1404 = vmatprep.subr.mxu0 0.0
        %1405 = vmatpush1.msra.mxu0 0.0
        %1406 = vmatprep.subr.mxu0 0.0
        %1407 = vmatpush1.msra.mxu0 0.0
        %1408 = vmatprep.subr.mxu0 0.0
        %1409 = vmatpush1.msra.mxu0 0.0
        %1410 = vmatprep.subr.mxu0 0.0
        %1411 = vmatpush1.msra.mxu0 0.0
        %1412 = vmatprep.subr.mxu0 0.0
        %1413 = vmatpush1.msra.mxu0 0.0
        %1414 = vmatprep.subr.mxu0 0.0
        %1415 = vmatpush1.msra.mxu0 0.0
        %1416 = vmatprep.subr.mxu0 0.0
        %1417 = vmatpush1.msra.mxu0 0.0
        %1418 = vmatprep.subr.mxu0 0.0
        %1419 = vmatpush1.msra.mxu0 0.0
        %1420 = vmatprep.subr.mxu0 0.0
        %1421 = vmatpush1.msra.mxu0 0.0
        %1422 = vmatprep.subr.mxu0 0.0
        %1423 = vmatpush1.msra.mxu0 0.0
        %1424 = vmatprep.subr.mxu0 0.0
        %1425 = vmatpush1.msra.mxu0 0.0
        %1426 = vmatprep.mubr.f32.mxu0 0.0
        %1427 = vmatmul.mubr.f32.gmra.mrb[0].mxu0 %v1357
        %v1428 = vpop.f32.mrb[0].mxu0
        %v1429 = vadd.f32 0.0, %v1428
        %v1430 = vpop.f32.mrb[0].mxu0
        %1431 = vdwg.mxu0
        %v1432 = vadd.f32 %v1339, %v1429
        %v1433 = vld [vmem:[%s6] sm:$0x3]
        %1435 = vset.pattern.permute.xlu0 0
        %1436 = vperm.xlu0 %1435, %v1433
        %v1437 = vpop.permute.xlu0 %1436
        %v1439 = vmul.f32 %v1432, %v1437
        %v1440 = vld [vmem:[%s7] sm:$0x3]
        %1442 = vset.pattern.permute.xlu0 0
        %1443 = vperm.xlu0 %1442, %v1440
        %v1444 = vpop.permute.xlu0 %1443
        %v1446 = vadd.f32 %v1439, %v1444
        %v1447 = vmax.f32 %v1446, 0.0
        %v1448 = vld [vmem:[%s8] sm:$0xff]
        %v1449 = vld [vmem:[%s8 + $0x8] sm:$0xff]
        %v1451 = vsel %vm636, %v1448, 0
        %v1454 = vsel %vm636, %v1449, 0
        %v1457 = vsel %vm639, %v1447, 0
        %1459 = vmatprep.subr.mxu0 0.0
        %1460 = vmatpush1.msra.mxu0 %v1457
        %1461 = vmatprep.subr.mxu0 0.0
        %1462 = vmatpush1.msra.mxu0 0.0
        %1463 = vmatprep.subr.mxu0 0.0
        %1464 = vmatpush1.msra.mxu0 0.0
        %1465 = vmatprep.subr.mxu0 0.0
        %1466 = vmatpush1.msra.mxu0 0.0
        %1467 = vmatprep.subr.mxu0 0.0
        %1468 = vmatpush1.msra.mxu0 0.0
        %1469 = vmatprep.subr.mxu0 0.0
        %1470 = vmatpush1.msra.mxu0 0.0
        %1471 = vmatprep.subr.mxu0 0.0
        %1472 = vmatpush1.msra.mxu0 0.0
        %1473 = vmatprep.subr.mxu0 0.0
        %1474 = vmatpush1.msra.mxu0 0.0
        %1475 = vmatprep.subr.mxu0 0.0
        %1476 = vmatpush1.msra.mxu0 0.0
        %1477 = vmatprep.subr.mxu0 0.0
        %1478 = vmatpush1.msra.mxu0 0.0
        %1479 = vmatprep.subr.mxu0 0.0
        %1480 = vmatpush1.msra.mxu0 0.0
        %1481 = vmatprep.subr.mxu0 0.0
        %1482 = vmatpush1.msra.mxu0 0.0
        %1483 = vmatprep.subr.mxu0 0.0
        %1484 = vmatpush1.msra.mxu0 0.0
        %1485 = vmatprep.subr.mxu0 0.0
        %1486 = vmatpush1.msra.mxu0 0.0
        %1487 = vmatprep.subr.mxu0 0.0
        %1488 = vmatpush1.msra.mxu0 0.0
        %1489 = vmatprep.subr.mxu0 0.0
        %1490 = vmatpush1.msra.mxu0 0.0
        %1491 = vmatprep.subr.mxu0 0.0
        %1492 = vmatpush1.msra.mxu0 0.0
        %1493 = vmatprep.subr.mxu0 0.0
        %1494 = vmatpush1.msra.mxu0 0.0
        %1495 = vmatprep.subr.mxu0 0.0
        %1496 = vmatpush1.msra.mxu0 0.0
        %1497 = vmatprep.subr.mxu0 0.0
        %1498 = vmatpush1.msra.mxu0 0.0
        %1499 = vmatprep.subr.mxu0 0.0
        %1500 = vmatpush1.msra.mxu0 0.0
        %1501 = vmatprep.subr.mxu0 0.0
        %1502 = vmatpush1.msra.mxu0 0.0
        %1503 = vmatprep.subr.mxu0 0.0
        %1504 = vmatpush1.msra.mxu0 0.0
        %1505 = vmatprep.subr.mxu0 0.0
        %1506 = vmatpush1.msra.mxu0 0.0
        %1507 = vmatprep.subr.mxu0 0.0
        %1508 = vmatpush1.msra.mxu0 0.0
        %1509 = vmatprep.subr.mxu0 0.0
        %1510 = vmatpush1.msra.mxu0 0.0
        %1511 = vmatprep.subr.mxu0 0.0
        %1512 = vmatpush1.msra.mxu0 0.0
        %1513 = vmatprep.subr.mxu0 0.0
        %1514 = vmatpush1.msra.mxu0 0.0
        %1515 = vmatprep.subr.mxu0 0.0
        %1516 = vmatpush1.msra.mxu0 0.0
        %1517 = vmatprep.subr.mxu0 0.0
        %1518 = vmatpush1.msra.mxu0 0.0
        %1519 = vmatprep.subr.mxu0 0.0
        %1520 = vmatpush1.msra.mxu0 0.0
        %1521 = vmatprep.subr.mxu0 0.0
        %1522 = vmatpush1.msra.mxu0 0.0
        %1523 = vmatprep.mubr.f32.mxu0 0.0
        %1524 = vmatmul.mubr.f32.gmra.mrb[0].mxu0 %v1451
        %v1525 = vpop.f32.mrb[0].mxu0
        %v1526 = vadd.f32 0.0, %v1525
        %v1527 = vpop.f32.mrb[0].mxu0
        %1528 = vmatprep.mubr.f32.mxu0 0.0
        %1529 = vmatmul.mubr.f32.gmra.mrb[0].mxu0 %v1454
        %v1530 = vpop.f32.mrb[0].mxu0
        %v1531 = vadd.f32 0.0, %v1530
        %v1532 = vpop.f32.mrb[0].mxu0
        %1533 = vdwg.mxu0
        %v1534 = vld [vmem:[%s9] sm:$0xff]
        %v1535 = vld [vmem:[%s9 + $0x8] sm:$0xff]
        %1537 = vset.pattern.permute.xlu0 0
        %1538 = vperm.xlu0 %1537, %v1534
        %v1539 = vpop.permute.xlu0 %1538
        %1542 = vset.pattern.permute.xlu0 0
        %1543 = vperm.xlu0 %1542, %v1535
        %v1544 = vpop.permute.xlu0 %1543
        %v1546 = vmul.f32 %v1526, %v1539
        %v1547 = vmul.f32 %v1531, %v1544
        %v1548 = vld [vmem:[%s10] sm:$0xff]
        %v1549 = vld [vmem:[%s10 + $0x8] sm:$0xff]
        %1551 = vset.pattern.permute.xlu0 0
        %1552 = vperm.xlu0 %1551, %v1548
        %v1553 = vpop.permute.xlu0 %1552
        %1556 = vset.pattern.permute.xlu0 0
        %1557 = vperm.xlu0 %1556, %v1549
        %v1558 = vpop.permute.xlu0 %1557
        %v1560 = vadd.f32 %v1546, %v1553
        %v1561 = vadd.f32 %v1547, %v1558
        %v1562 = vmax.f32 %v1560, 0.0
        %v1563 = vmax.f32 %v1561, 0.0
        %v1564 = vadd.f32 %v1562, %v503
        %v1565 = vmax.f32 %v1564, 0.0
        %vm1566 = vcmask 523264
        %1567 = vst.msk [vmem:[%s447] sm:$0xff] %vm1566, %v1565
        %1568 = vst.msk [vmem:[%s447 + $0x8] sm:$0xff] %vm1566, %v1563
        %1569 = vst.msk [vmem:[%s454] sm:$0xff] %vm1566, %v505
        %s1570 = sand.u32 %s295, 1
        %s1571 = scalar_lea.sflag [#allocation4], %s1570
        %s1572 = sand.u32 %s295, 1
        %s1573 = smul.addr %s1572, 16
        %s1574 = scalar_lea.vmem [#allocation3], %s1573
        %s1575 = sand.u32 %s323, 1
        %s1576 = scalar_lea.sflag [#allocation6], %s1575
        %s1577 = sand.u32 %s323, 1
        %s1578 = smul.addr %s1577, 8
        %s1579 = scalar_lea.vmem [#allocation5], %s1578
        // Predicated region
        $region65: #{tpu_custom_call.1} parent=63 // pred_check
          %p1580 = pneg %p305
        $region66: #{tpu_custom_call.1} parent=63 // pred_check_branch
          %1582 = sbr.rel (%p1580) target = $region68
        $region67: #{tpu_custom_call.1} parent=63 // pred_region
          %s1584 = ssub.s32 256, 256
          %1585 = vsyncadd %s1571, %s1584
          %s1586 = smul.addr %s34, 2
          %s1587 = sadd.s32 %s35, %s1586
          %s1588 = smul.addr %s1587, 128
          %s1589 = scalar_lea.hbm %s11, %s1588
          %s1590 = sshll.u32 %s1574, 4
          %s1591 = int_to_ptr.vmem [resolvable:$true] %s1590
          %1596 = dma.vmem_to_hbm [thread:$0]  %s1591, 256, %s1589, %s1571, 128, 128, 8
        $region68: #{tpu_custom_call.1} parent=63 // pred_fallthru
          _
        // Predicated region
        $region69: #{tpu_custom_call.1} parent=63 // pred_check
          %p1597 = pneg %p333
        $region70: #{tpu_custom_call.1} parent=63 // pred_check_branch
          %1599 = sbr.rel (%p1597) target = $region72
        $region71: #{tpu_custom_call.1} parent=63 // pred_region
          %s1601 = ssub.s32 128, 128
          %1602 = vsyncadd %s1576, %s1601
          %s1603 = sadd.s32 %s35, %s34
          %s1604 = smul.addr %s1603, 128
          %s1605 = scalar_lea.hbm %s12, %s1604
          %s1607 = sshll.u32 %s1579, 4
          %s1608 = int_to_ptr.vmem [resolvable:$true] %s1607
          %1610 = dma.vmem_to_hbm [thread:$0]  %s1608, 128, %s1605, %s1576
        $region72: #{tpu_custom_call.1} parent=63 // pred_fallthru
          _
      $region64: #{tpu_custom_call.1} parent=5 // pred_fallthru
        _
      %p1611 = scmp.le.s32.totalorder 2, %s25
      // Predicated region
      $region73: #{tpu_custom_call.1} parent=5 // pred_check
        %p1612 = pneg %p1611
      $region74: #{tpu_custom_call.1} parent=5 // pred_check_branch
        %1614 = sbr.rel (%p1612) target = $region76
      $region75: #{tpu_custom_call.1} parent=5 // pred_region
        %s1615 = ssub.s32 %s25, 2
        // Predicated region
        $region77: #{tpu_custom_call.1} parent=75 // pred_check
          %p1616 = pneg %p311
        $region78: #{tpu_custom_call.1} parent=75 // pred_check_branch
          %1618 = sbr.rel (%p1616) target = $region80
        $region79: #{tpu_custom_call.1} parent=75 // pred_region
          %s1619 = sand.u32 %s296, 1
          %s1620 = scalar_lea.sflag [#allocation4], %s1619
          %s1621 = sand.u32 %s296, 1
          %s1622 = smul.addr %s1621, 16
          %s1623 = scalar_lea.vmem [#allocation3], %s1622
          %1624 = dma.done %s1620, 256
        $region80: #{tpu_custom_call.1} parent=75 // pred_fallthru
          _
        // Predicated region
        $region81: #{tpu_custom_call.1} parent=75 // pred_check
          %p1625 = pneg %p339
        $region82: #{tpu_custom_call.1} parent=75 // pred_check_branch
          %1627 = sbr.rel (%p1625) target = $region84
        $region83: #{tpu_custom_call.1} parent=75 // pred_region
          %s1628 = sand.u32 %s324, 1
          %s1629 = scalar_lea.sflag [#allocation6], %s1628
          %s1630 = sand.u32 %s324, 1
          %s1631 = smul.addr %s1630, 8
          %s1632 = scalar_lea.vmem [#allocation5], %s1631
          %1633 = dma.done %s1629, 128
        $region84: #{tpu_custom_call.1} parent=75 // pred_fallthru
          _
      $region76: #{tpu_custom_call.1} parent=5 // pred_fallthru
        _
    $region6: #{tpu_custom_call.1} parent=1 // loop_footer
      %s29 = sadd.s32 1, %s25
    $region7: #{tpu_custom_call.1} parent=1 // loop_footer_branch
      %24 = sbr.rel target = $region3
    $region8: #{tpu_custom_call.1} parent=1 // loop_exit
      _
    %1634 = vsyncpa [#allocation4], 1
    %s1635 = scalar_lea.sflag [#allocation4], 1
    %1636 = vsyncpa %s1635, 1
    %1637 = vsyncpa [#allocation6], 1
    %s1638 = scalar_lea.sflag [#allocation6], 1
    %1639 = vsyncpa %s1638, 1

</llo_original>
